<compile_context>
chip_gen: v7x
topology: tpu7x:2x2x1
jax: 0.10.0
libtpu: 0.0.40
codegen_flags: <defaults>
</compile_context>

<pallas_src>
import functools

import jax
import jax.numpy as jnp
from jax import lax
from jax.experimental import pallas as pl
from jax.experimental.pallas import tpu as pltpu

HIDDEN = 64        # default `hidden` of EightMLP
INNER = 16         # MLP's fixed intermediate width
NUM_LAYERS = 8
NUM_FUSED = NUM_LAYERS - 1   # seven fused 16x16 middles

_INV_SQRT2 = 0.7071067811865476


def _gelu_exact(x):
    # PyTorch nn.GELU() default is the exact (erf) formulation; computed in f32.
    return 0.5 * x * (1.0 + lax.erf(x * _INV_SQRT2))


def eight_mlp_kernel(x_ref, w1_ref, wf_ref, w2_ref, o_ref):
    # x_ref : (bm, P*HIDDEN)          batch tile, P batch rows packed per lane-row (caller dtype)
    # w1_ref: (P*HIDDEN, P*INNER)     block-diag fc1.weight.T of layer 0   (MXU operand dtype)
    # wf_ref: (7, P*INNER, P*INNER)   block-diag fused (W2_i @ W1_{i+1})   (MXU operand dtype)
    # w2_ref: (P*INNER, P*HIDDEN)     block-diag fc2.weight.T of layer 7   (MXU operand dtype)
    # o_ref : (bm, P*HIDDEN)          output tile in the caller's dtype
    op_dt = w1_ref.dtype                      # bf16 operands with f32 accumulation (or f32)
    h = x_ref[...].astype(op_dt)
    t = _gelu_exact(jnp.dot(h, w1_ref[...], preferred_element_type=jnp.float32))

    def body(l, t):
        u = jnp.dot(t.astype(op_dt), wf_ref[l], preferred_element_type=jnp.float32)
        return _gelu_exact(u)

    t = lax.fori_loop(0, NUM_FUSED, body, t, unroll=True)

    out = jnp.dot(t.astype(op_dt), w2_ref[...], preferred_element_type=jnp.float32)
    o_ref[...] = out.astype(o_ref.dtype)


def _round_up(a, b):
    return ((a + b - 1) // b) * b


def _block_diag(w, pack):
    """Turn (..., K, N) weights into block-diagonal (..., pack*K, pack*N) weights."""
    K, N = w.shape[-2:]
    out = jnp.zeros(w.shape[:-2] + (pack * K, pack * N), dtype=w.dtype)
    for p in range(pack):
        out = out.at[..., p * K:(p + 1) * K, p * N:(p + 1) * N].set(w)
    return out


@functools.lru_cache(maxsize=1)
def default_config():
    """Per-generation defaults: packing factor, MXU operand dtype, packed-row tile, min grid steps."""
    try:
        kind = jax.devices()[0].device_kind.lower()
    except Exception:
        kind = ""
    if ("v5 lite" in kind) or ("v5e" in kind) or ("v5litepod" in kind):
        # 128-deep MXU -> 8-way packing makes the fused middles 128x128; bf16 MXU operands.
        return dict(pack=8, use_bf16=True, block_rows=1024, min_steps=1, vmem_limit=64 << 20)
    if "v6" in kind:
        # 256-deep MXU -> 16-way packing (middles 256x256); bf16 operands; big tiles.
        return dict(pack=16, use_bf16=True, block_rows=1024, min_steps=1, vmem_limit=64 << 20)
    if "v7" in kind:
        # Same packing as v6e; smaller tile (64 MiB VMEM) and >=2 grid steps for the 2 TCs.
        return dict(pack=16, use_bf16=True, block_rows=512, min_steps=2, vmem_limit=None)
    # Unknown device (v4/v5p/CPU-interpret): safe f32 operands, 8-way packing.
    return dict(pack=8, use_bf16=False, block_rows=512, min_steps=1, vmem_limit=None)


def eight_mlp(x, w1, w2, *, pack=None, block_rows=None, use_bf16=None, min_steps=None):
    """Fused EightMLP forward.

    x : (B, 64) activations.
    w1: (8, 64, 16)  = fc1.weight.T per layer   (y = x @ W.T convention)
    w2: (8, 16, 64)  = fc2.weight.T per layer
    """
    cfg = default_config()
    P = cfg["pack"] if pack is None else pack
    block_rows = cfg["block_rows"] if block_rows is None else block_rows
    use_bf16 = cfg["use_bf16"] if use_bf16 is None else use_bf16
    min_steps = cfg["min_steps"] if min_steps is None else min_steps
    vmem_limit = cfg["vmem_limit"]

    B, H = x.shape
    assert H == HIDDEN, f"expected last dim {HIDDEN}, got {H}"
    in_dtype = x.dtype
    op_dtype = jnp.bfloat16 if use_bf16 else jnp.float32

    # ---- algebraic fusion (host side, f32): W2_i @ W1_{i+1} has no nonlinearity between ----
    w1f = w1.astype(jnp.float32)
    w2f = w2.astype(jnp.float32)
    w_first = w1f[0]                                                    # (64, 16)
    w_fused = jnp.einsum("lij,ljk->lik", w2f[:-1], w1f[1:])             # (7, 16, 16), f32
    w_last = w2f[-1]                                                    # (16, 64)

    w1_bd = _block_diag(w_first, P).astype(op_dtype)                    # (P*64, P*16)
    wf_bd = _block_diag(w_fused, P).astype(op_dtype)                    # (7, P*16, P*16)
    w2_bd = _block_diag(w_last, P).astype(op_dtype)                     # (P*16, P*64)

    # ---- pack the batch into the lane dimension: (B, 64) -> (rows, P*64) ----
    rows = pl.cdiv(B, P)
    steps = pl.cdiv(rows, block_rows)
    if rows >= 16:
        steps = max(steps, min_steps)        # v7x: keep >=2 grid steps so both TCs get work
    bm = max(8, _round_up(pl.cdiv(rows, steps), 8))     # balanced tile, sublane-aligned
    rows_padded = steps * bm
    B_padded = rows_padded * P

    x_p = x if B_padded == B else jnp.pad(x, ((0, B_padded - B), (0, 0)))
    x_p = x_p.reshape(rows_padded, P * HIDDEN)          # caller dtype; cast happens in-kernel

    item_in = jnp.dtype(in_dtype).itemsize
    item_op = jnp.dtype(op_dtype).itemsize
    cost = pl.CostEstimate(
        flops=2 * B_padded * (HIDDEN * INNER + NUM_FUSED * INNER * INNER + INNER * HIDDEN),
        transcendentals=B_padded * NUM_LAYERS * INNER,
        bytes_accessed=int(2 * rows_padded * P * HIDDEN * item_in
                           + (w1_bd.size + wf_bd.size + w2_bd.size) * item_op),
    )

    cp_kwargs = dict(dimension_semantics=("parallel",))
    if vmem_limit is not None:
        cp_kwargs["vmem_limit_bytes"] = vmem_limit

    out_p = pl.pallas_call(
        eight_mlp_kernel,
        out_shape=jax.ShapeDtypeStruct((rows_padded, P * HIDDEN), in_dtype),
        grid_spec=pltpu.PrefetchScalarGridSpec(
            num_scalar_prefetch=0,
            grid=(steps,),
            in_specs=[
                pl.BlockSpec((bm, P * HIDDEN), lambda i: (i, 0)),
                # Weights: full arrays, constant index_map -> DMA'd once, resident in VMEM.
                pl.BlockSpec((P * HIDDEN, P * INNER), lambda i: (0, 0)),
                pl.BlockSpec((NUM_FUSED, P * INNER, P * INNER), lambda i: (0, 0, 0)),
                pl.BlockSpec((P * INNER, P * HIDDEN), lambda i: (0, 0)),
            ],
            out_specs=pl.BlockSpec((bm, P * HIDDEN), lambda i: (i, 0)),
        ),
        compiler_params=pltpu.CompilerParams(**cp_kwargs),
        cost_estimate=cost,
    )(x_p, w1_bd, wf_bd, w2_bd)

    return out_p.reshape(B_padded, HIDDEN)[:B]


# ----------------------------- references & test weights -----------------------------

def make_constant_weights(dtype=jnp.float32):
    """Deterministic weights exactly as in the PyTorch __init__:
       mlp{i+1}: fc1.weight.fill_(i), fc2.weight.fill_(2*i). (Constant fill => W == W.T.)"""
    w1 = jnp.stack([jnp.full((HIDDEN, INNER), float(i), dtype=dtype) for i in range(NUM_LAYERS)])
    w2 = jnp.stack([jnp.full((INNER, HIDDEN), float(2 * i), dtype=dtype) for i in range(NUM_LAYERS)])
    return w1, w2


def eight_mlp_reference(x, w1, w2):
    """Pure-JAX f32 reference (unfused, unpacked), matching the PyTorch forward."""
    h = x.astype(jnp.float32)
    w1c = w1.astype(jnp.float32)
    w2c = w2.astype(jnp.float32)
    for l in range(NUM_LAYERS):
        t = jnp.dot(h, w1c[l], preferred_element_type=jnp.float32)
        t = _gelu_exact(t)
        h = jnp.dot(t, w2c[l], preferred_element_type=jnp.float32)
    return h.astype(x.dtype)


if __name__ == "__main__":
    key = jax.random.PRNGKey(0)
    k1, k2, k3 = jax.random.split(key, 3)

    batch = 16
    x = jax.random.normal(k1, (batch, HIDDEN), dtype=jnp.float32)

    # Random weights scaled so activations stay O(1) across 8 layers. (The module's actual
    # constant-fill weights make the output identically zero -> vacuous check; tested below.)
    w1 = 0.2 * jax.random.normal(k2, (NUM_LAYERS, HIDDEN, INNER), dtype=jnp.float32)
    w2 = 0.2 * jax.random.normal(k3, (NUM_LAYERS, INNER, HIDDEN), dtype=jnp.float32)

    ref_f32 = eight_mlp_reference(x, w1, w2)

    # 1) f32 operands, 8-way lane packing (v5e layout) -- tight tolerance.
    out8 = jax.block_until_ready(eight_mlp(x, w1, w2, pack=8, use_bf16=False))
    assert out8.shape == (batch, HIDDEN)
    assert jnp.allclose(out8, ref_f32, atol=2e-4, rtol=2e-4), "pack=8 f32 mismatch"

    # 2) f32 operands, 16-way lane packing (v6e/v7x layout) -- tight tolerance.
    out16 = jax.block_until_ready(eight_mlp(x, w1, w2, pack=16, use_bf16=False))
    assert jnp.allclose(out16, ref_f32, atol=2e-4, rtol=2e-4), "pack=16 f32 mismatch"

    # 3) batch padding path (batch not a multiple of the packing factor).
    xb = jax.random.normal(jax.random.PRNGKey(1), (13, HIDDEN), dtype=jnp.float32)
    out_pad = jax.block_until_ready(eight_mlp(xb, w1, w2, pack=16, use_bf16=False))
    assert jnp.allclose(out_pad, eight_mlp_reference(xb, w1, w2), atol=2e-4, rtol=2e-4), \
        "padded-batch mismatch"

    # 4) multi-step grid path (balanced bm, >=2 grid steps).
    xg = jax.random.normal(jax.random.PRNGKey(2), (272, HIDDEN), dtype=jnp.float32)
    out_g = jax.block_until_ready(eight_mlp(xg, w1, w2, pack=16, use_bf16=False, block_rows=8))
    assert jnp.allclose(out_g, eight_mlp_reference(xg, w1, w2), atol=2e-4, rtol=2e-4), \
        "multi-step grid mismatch"

    # 5) device-default config (bf16 MXU operands on TPU) vs. the f32 reference, loose tolerance.
    #    bf16 quantizes the MXU inputs each layer, so error compounds (GELU/accumulation stay f32).
    out_auto = jax.block_until_ready(eight_mlp(x, w1, w2)).astype(jnp.float32)
    err = float(jnp.max(jnp.abs(out_auto - ref_f32.astype(jnp.float32))))
    tol = 5e-2 * (float(jnp.max(jnp.abs(ref_f32))) + 1.0)
    assert err <= tol, f"device-default config mismatch: err={err} tol={tol}"

    # 6) the actual EightMLP constant-fill weights: layer-0 weight is 0 => output exactly 0
    #    for any input (matches PyTorch semantics).
    w1c, w2c = make_constant_weights()
    out_c = jax.block_until_ready(eight_mlp(x, w1c, w2c, pack=8, use_bf16=False))
    assert bool(jnp.all(out_c == 0.0)), "constant-fill weights should give exactly zero"

    print("KERNEL_OK")
</pallas_src>

<mosaic_0001>
module attributes {stable_mosaic.version = 11 : i64} {
  func.func @eight_mlp_kernel(%arg0: i32, %arg1: memref<8x512xf32, #tpu.memory_space<vmem>>, %arg2: memref<512x128xf32, #tpu.memory_space<vmem>>, %arg3: memref<7x128x128xf32, #tpu.memory_space<vmem>>, %arg4: memref<128x512xf32, #tpu.memory_space<vmem>>, %arg5: memref<8x512xf32, #tpu.memory_space<vmem>>) attributes {dimension_semantics = [#tpu.dimension_semantics<parallel>], iteration_bounds = array<i64: 1>, scalar_prefetch = 0 : i64, scratch_operands = 0 : i64, tpu.core_type = #tpu.core_type<tc>, window_params = [{transform_indices = @transform_0, window_bounds = array<i64: 8, 512>}, {pipeline_mode = #tpu.pipeline_mode<synchronous>, transform_indices = @transform_1, window_bounds = array<i64: 512, 128>}, {pipeline_mode = #tpu.pipeline_mode<synchronous>, transform_indices = @transform_2, window_bounds = array<i64: 7, 128, 128>}, {pipeline_mode = #tpu.pipeline_mode<synchronous>, transform_indices = @transform_3, window_bounds = array<i64: 128, 512>}, {transform_indices = @transform_4, window_bounds = array<i64: 8, 512>}]} {
    %c0 = arith.constant 0 : index
    %c0_0 = arith.constant 0 : index
    %0 = vector.load %arg1[%c0, %c0_0] : memref<8x512xf32, #tpu.memory_space<vmem>>, vector<8x512xf32>
    %c0_1 = arith.constant 0 : index
    %c0_2 = arith.constant 0 : index
    %1 = vector.load %arg2[%c0_1, %c0_2] : memref<512x128xf32, #tpu.memory_space<vmem>>, vector<512x128xf32>
    %cst = arith.constant dense<0.000000e+00> : vector<8x128xf32>
    %2 = tpu.matmul %0, %1, %cst {dimension_numbers = #tpu.dot_dimension_numbers<[1], [0], [0], [1], [0, 0, 1, 1], [], []>} : vector<8x512xf32>, vector<512x128xf32>, vector<8x128xf32> -> vector<8x128xf32>
    %cst_3 = arith.constant 5.000000e-01 : f32
    %3 = vector.broadcast %cst_3 : f32 to vector<8x128xf32>
    %4 = arith.mulf %3, %2 : vector<8x128xf32>
    %cst_4 = arith.constant 0.707106769 : f32
    %5 = vector.broadcast %cst_4 : f32 to vector<8x128xf32>
    %6 = arith.mulf %2, %5 : vector<8x128xf32>
    %7 = math.erf %6 : vector<8x128xf32>
    %cst_5 = arith.constant 1.000000e+00 : f32
    %8 = vector.broadcast %cst_5 : f32 to vector<8x128xf32>
    %9 = arith.addf %8, %7 : vector<8x128xf32>
    %10 = arith.mulf %4, %9 : vector<8x128xf32>
    %c0_i32 = arith.constant 0 : i32
    %11 = arith.index_cast %c0_i32 : i32 to index
    %c0_6 = arith.constant 0 : index
    %c0_7 = arith.constant 0 : index
    %12 = vector.load %arg3[%11, %c0_6, %c0_7] : memref<7x128x128xf32, #tpu.memory_space<vmem>>, vector<1x128x128xf32>
    %13 = vector.shape_cast %12 : vector<1x128x128xf32> to vector<128x128xf32>
    %cst_8 = arith.constant dense<0.000000e+00> : vector<8x128xf32>
    %14 = tpu.matmul %10, %13, %cst_8 {dimension_numbers = #tpu.dot_dimension_numbers<[1], [0], [0], [1], [0, 0, 1, 1], [], []>} : vector<8x128xf32>, vector<128x128xf32>, vector<8x128xf32> -> vector<8x128xf32>
    %cst_9 = arith.constant 5.000000e-01 : f32
    %15 = vector.broadcast %cst_9 : f32 to vector<8x128xf32>
    %16 = arith.mulf %15, %14 : vector<8x128xf32>
    %cst_10 = arith.constant 0.707106769 : f32
    %17 = vector.broadcast %cst_10 : f32 to vector<8x128xf32>
    %18 = arith.mulf %14, %17 : vector<8x128xf32>
    %19 = math.erf %18 : vector<8x128xf32>
    %cst_11 = arith.constant 1.000000e+00 : f32
    %20 = vector.broadcast %cst_11 : f32 to vector<8x128xf32>
    %21 = arith.addf %20, %19 : vector<8x128xf32>
    %22 = arith.mulf %16, %21 : vector<8x128xf32>
    %c1_i32 = arith.constant 1 : i32
    %23 = arith.index_cast %c1_i32 : i32 to index
    %c0_12 = arith.constant 0 : index
    %c0_13 = arith.constant 0 : index
    %24 = vector.load %arg3[%23, %c0_12, %c0_13] : memref<7x128x128xf32, #tpu.memory_space<vmem>>, vector<1x128x128xf32>
    %25 = vector.shape_cast %24 : vector<1x128x128xf32> to vector<128x128xf32>
    %cst_14 = arith.constant dense<0.000000e+00> : vector<8x128xf32>
    %26 = tpu.matmul %22, %25, %cst_14 {dimension_numbers = #tpu.dot_dimension_numbers<[1], [0], [0], [1], [0, 0, 1, 1], [], []>} : vector<8x128xf32>, vector<128x128xf32>, vector<8x128xf32> -> vector<8x128xf32>
    %cst_15 = arith.constant 5.000000e-01 : f32
    %27 = vector.broadcast %cst_15 : f32 to vector<8x128xf32>
    %28 = arith.mulf %27, %26 : vector<8x128xf32>
    %cst_16 = arith.constant 0.707106769 : f32
    %29 = vector.broadcast %cst_16 : f32 to vector<8x128xf32>
    %30 = arith.mulf %26, %29 : vector<8x128xf32>
    %31 = math.erf %30 : vector<8x128xf32>
    %cst_17 = arith.constant 1.000000e+00 : f32
    %32 = vector.broadcast %cst_17 : f32 to vector<8x128xf32>
    %33 = arith.addf %32, %31 : vector<8x128xf32>
    %34 = arith.mulf %28, %33 : vector<8x128xf32>
    %c2_i32 = arith.constant 2 : i32
    %35 = arith.index_cast %c2_i32 : i32 to index
    %c0_18 = arith.constant 0 : index
    %c0_19 = arith.constant 0 : index
    %36 = vector.load %arg3[%35, %c0_18, %c0_19] : memref<7x128x128xf32, #tpu.memory_space<vmem>>, vector<1x128x128xf32>
    %37 = vector.shape_cast %36 : vector<1x128x128xf32> to vector<128x128xf32>
    %cst_20 = arith.constant dense<0.000000e+00> : vector<8x128xf32>
    %38 = tpu.matmul %34, %37, %cst_20 {dimension_numbers = #tpu.dot_dimension_numbers<[1], [0], [0], [1], [0, 0, 1, 1], [], []>} : vector<8x128xf32>, vector<128x128xf32>, vector<8x128xf32> -> vector<8x128xf32>
    %cst_21 = arith.constant 5.000000e-01 : f32
    %39 = vector.broadcast %cst_21 : f32 to vector<8x128xf32>
    %40 = arith.mulf %39, %38 : vector<8x128xf32>
    %cst_22 = arith.constant 0.707106769 : f32
    %41 = vector.broadcast %cst_22 : f32 to vector<8x128xf32>
    %42 = arith.mulf %38, %41 : vector<8x128xf32>
    %43 = math.erf %42 : vector<8x128xf32>
    %cst_23 = arith.constant 1.000000e+00 : f32
    %44 = vector.broadcast %cst_23 : f32 to vector<8x128xf32>
    %45 = arith.addf %44, %43 : vector<8x128xf32>
    %46 = arith.mulf %40, %45 : vector<8x128xf32>
    %c3_i32 = arith.constant 3 : i32
    %47 = arith.index_cast %c3_i32 : i32 to index
    %c0_24 = arith.constant 0 : index
    %c0_25 = arith.constant 0 : index
    %48 = vector.load %arg3[%47, %c0_24, %c0_25] : memref<7x128x128xf32, #tpu.memory_space<vmem>>, vector<1x128x128xf32>
    %49 = vector.shape_cast %48 : vector<1x128x128xf32> to vector<128x128xf32>
    %cst_26 = arith.constant dense<0.000000e+00> : vector<8x128xf32>
    %50 = tpu.matmul %46, %49, %cst_26 {dimension_numbers = #tpu.dot_dimension_numbers<[1], [0], [0], [1], [0, 0, 1, 1], [], []>} : vector<8x128xf32>, vector<128x128xf32>, vector<8x128xf32> -> vector<8x128xf32>
    %cst_27 = arith.constant 5.000000e-01 : f32
    %51 = vector.broadcast %cst_27 : f32 to vector<8x128xf32>
    %52 = arith.mulf %51, %50 : vector<8x128xf32>
    %cst_28 = arith.constant 0.707106769 : f32
    %53 = vector.broadcast %cst_28 : f32 to vector<8x128xf32>
    %54 = arith.mulf %50, %53 : vector<8x128xf32>
    %55 = math.erf %54 : vector<8x128xf32>
    %cst_29 = arith.constant 1.000000e+00 : f32
    %56 = vector.broadcast %cst_29 : f32 to vector<8x128xf32>
    %57 = arith.addf %56, %55 : vector<8x128xf32>
    %58 = arith.mulf %52, %57 : vector<8x128xf32>
    %c4_i32 = arith.constant 4 : i32
    %59 = arith.index_cast %c4_i32 : i32 to index
    %c0_30 = arith.constant 0 : index
    %c0_31 = arith.constant 0 : index
    %60 = vector.load %arg3[%59, %c0_30, %c0_31] : memref<7x128x128xf32, #tpu.memory_space<vmem>>, vector<1x128x128xf32>
    %61 = vector.shape_cast %60 : vector<1x128x128xf32> to vector<128x128xf32>
    %cst_32 = arith.constant dense<0.000000e+00> : vector<8x128xf32>
    %62 = tpu.matmul %58, %61, %cst_32 {dimension_numbers = #tpu.dot_dimension_numbers<[1], [0], [0], [1], [0, 0, 1, 1], [], []>} : vector<8x128xf32>, vector<128x128xf32>, vector<8x128xf32> -> vector<8x128xf32>
    %cst_33 = arith.constant 5.000000e-01 : f32
    %63 = vector.broadcast %cst_33 : f32 to vector<8x128xf32>
    %64 = arith.mulf %63, %62 : vector<8x128xf32>
    %cst_34 = arith.constant 0.707106769 : f32
    %65 = vector.broadcast %cst_34 : f32 to vector<8x128xf32>
    %66 = arith.mulf %62, %65 : vector<8x128xf32>
    %67 = math.erf %66 : vector<8x128xf32>
    %cst_35 = arith.constant 1.000000e+00 : f32
    %68 = vector.broadcast %cst_35 : f32 to vector<8x128xf32>
    %69 = arith.addf %68, %67 : vector<8x128xf32>
    %70 = arith.mulf %64, %69 : vector<8x128xf32>
    %c5_i32 = arith.constant 5 : i32
    %71 = arith.index_cast %c5_i32 : i32 to index
    %c0_36 = arith.constant 0 : index
    %c0_37 = arith.constant 0 : index
    %72 = vector.load %arg3[%71, %c0_36, %c0_37] : memref<7x128x128xf32, #tpu.memory_space<vmem>>, vector<1x128x128xf32>
    %73 = vector.shape_cast %72 : vector<1x128x128xf32> to vector<128x128xf32>
    %cst_38 = arith.constant dense<0.000000e+00> : vector<8x128xf32>
    %74 = tpu.matmul %70, %73, %cst_38 {dimension_numbers = #tpu.dot_dimension_numbers<[1], [0], [0], [1], [0, 0, 1, 1], [], []>} : vector<8x128xf32>, vector<128x128xf32>, vector<8x128xf32> -> vector<8x128xf32>
    %cst_39 = arith.constant 5.000000e-01 : f32
    %75 = vector.broadcast %cst_39 : f32 to vector<8x128xf32>
    %76 = arith.mulf %75, %74 : vector<8x128xf32>
    %cst_40 = arith.constant 0.707106769 : f32
    %77 = vector.broadcast %cst_40 : f32 to vector<8x128xf32>
    %78 = arith.mulf %74, %77 : vector<8x128xf32>
    %79 = math.erf %78 : vector<8x128xf32>
    %cst_41 = arith.constant 1.000000e+00 : f32
    %80 = vector.broadcast %cst_41 : f32 to vector<8x128xf32>
    %81 = arith.addf %80, %79 : vector<8x128xf32>
    %82 = arith.mulf %76, %81 : vector<8x128xf32>
    %c6_i32 = arith.constant 6 : i32
    %83 = arith.index_cast %c6_i32 : i32 to index
    %c0_42 = arith.constant 0 : index
    %c0_43 = arith.constant 0 : index
    %84 = vector.load %arg3[%83, %c0_42, %c0_43] : memref<7x128x128xf32, #tpu.memory_space<vmem>>, vector<1x128x128xf32>
    %85 = vector.shape_cast %84 : vector<1x128x128xf32> to vector<128x128xf32>
    %cst_44 = arith.constant dense<0.000000e+00> : vector<8x128xf32>
    %86 = tpu.matmul %82, %85, %cst_44 {dimension_numbers = #tpu.dot_dimension_numbers<[1], [0], [0], [1], [0, 0, 1, 1], [], []>} : vector<8x128xf32>, vector<128x128xf32>, vector<8x128xf32> -> vector<8x128xf32>
    %cst_45 = arith.constant 5.000000e-01 : f32
    %87 = vector.broadcast %cst_45 : f32 to vector<8x128xf32>
    %88 = arith.mulf %87, %86 : vector<8x128xf32>
    %cst_46 = arith.constant 0.707106769 : f32
    %89 = vector.broadcast %cst_46 : f32 to vector<8x128xf32>
    %90 = arith.mulf %86, %89 : vector<8x128xf32>
    %91 = math.erf %90 : vector<8x128xf32>
    %cst_47 = arith.constant 1.000000e+00 : f32
    %92 = vector.broadcast %cst_47 : f32 to vector<8x128xf32>
    %93 = arith.addf %92, %91 : vector<8x128xf32>
    %94 = arith.mulf %88, %93 : vector<8x128xf32>
    %c7_i32 = arith.constant 7 : i32
    %c0_48 = arith.constant 0 : index
    %c0_49 = arith.constant 0 : index
    %95 = vector.load %arg4[%c0_48, %c0_49] : memref<128x512xf32, #tpu.memory_space<vmem>>, vector<128x512xf32>
    %cst_50 = arith.constant dense<0.000000e+00> : vector<8x512xf32>
    %96 = tpu.matmul %94, %95, %cst_50 {dimension_numbers = #tpu.dot_dimension_numbers<[1], [0], [0], [1], [0, 0, 1, 1], [], []>} : vector<8x128xf32>, vector<128x512xf32>, vector<8x512xf32> -> vector<8x512xf32>
    %c0_51 = arith.constant 0 : index
    %c0_52 = arith.constant 0 : index
    %97 = vector.load %arg5[%c0_51, %c0_52] : memref<8x512xf32, #tpu.memory_space<vmem>>, vector<8x512xf32>
    tpu.vector_store %arg5[%c0_51, %c0_52], %96 {strides = array<i32>} : memref<8x512xf32, #tpu.memory_space<vmem>>, vector<8x512xf32>,
    return
  }
  func.func @transform_0(%arg0: i32) -> (i32, i32) {
    %c0_i32 = arith.constant 0 : i32
    %c0_i32_0 = arith.constant 0 : i32
    return %arg0, %c0_i32 : i32, i32
  }
  func.func @transform_1(%arg0: i32) -> (i32, i32) {
    %c0_i32 = arith.constant 0 : i32
    %c0_i32_0 = arith.constant 0 : i32
    %c0_i32_1 = arith.constant 0 : i32
    return %c0_i32, %c0_i32_0 : i32, i32
  }
  func.func @transform_2(%arg0: i32) -> (i32, i32, i32) {
    %c0_i32 = arith.constant 0 : i32
    %c0_i32_0 = arith.constant 0 : i32
    %c0_i32_1 = arith.constant 0 : i32
    %c0_i32_2 = arith.constant 0 : i32
    return %c0_i32, %c0_i32_0, %c0_i32_1 : i32, i32, i32
  }
  func.func @transform_3(%arg0: i32) -> (i32, i32) {
    %c0_i32 = arith.constant 0 : i32
    %c0_i32_0 = arith.constant 0 : i32
    %c0_i32_1 = arith.constant 0 : i32
    return %c0_i32, %c0_i32_0 : i32, i32
  }
  func.func @transform_4(%arg0: i32) -> (i32, i32) {
    %c0_i32 = arith.constant 0 : i32
    %c0_i32_0 = arith.constant 0 : i32
    return %arg0, %c0_i32 : i32, i32
  }
}

</mosaic_0001>

<llo_original>
// kernel: tpu_custom_call.1
$region0: #{tpu_custom_call.1}
  #allocation0 [shape = 'u32[]', space=smem, size = 0x4, offset = 0x4, fixed_abs, tag = 'smem constant byte address 0x4 - core index']
  #allocation1 [shape = 'u32[144,128]{1,0:T(1,128)}', space=vmem, size = 0x12000, scoped, tag = 'internal scratch']
  %s0 = inlined_call_operand.hbm [shape: f32[8,512], index: 0, kind: input, shape index: {}]
  %s1 = inlined_call_operand.hbm [shape: f32[512,128], index: 1, kind: input, shape index: {}]
  %s2 = inlined_call_operand.hbm [shape: f32[7,128,128], index: 2, kind: input, shape index: {}]
  %s3 = inlined_call_operand.hbm [shape: f32[128,512], index: 3, kind: input, shape index: {}]
  %s4 = inlined_call_operand.hbm [shape: f32[8,512], index: 4, kind: output, shape index: {}]
  %s5 = sld [smem:[#allocation0]]
  $region42: #{tpu_custom_call.1} parent=0
    _
  %s7 = ssub.s32 1, %s5
  %s8 = scalar_select 0, %s7, %s5
  $region1: #{tpu_custom_call.1} parent=0
    #allocation2 [shape = 'u8[16384]{0}', space=vmem, size = 0x4000, scoped, tag = 'input window, operand 0, single buffered']
    #allocation3 [shape = 's32[1]{0}', space=sflag, size = 0x4, scoped, tag = 'scoped memory for tpu_custom_call.1']
    #allocation4 [shape = 's32[1]{0}', space=sflag, size = 0x4, scoped, tag = 'scoped memory for tpu_custom_call.1']
    #allocation5 [shape = 'u8[262144]{0}', space=vmem, size = 0x40000, scoped, tag = 'input window, operand 1, single buffered']
    #allocation6 [shape = 's32[1]{0}', space=sflag, size = 0x4, scoped, tag = 'scoped memory for tpu_custom_call.1']
    #allocation7 [shape = 'u8[458752]{0}', space=vmem, size = 0x70000, scoped, tag = 'input window, operand 2, single buffered']
    #allocation8 [shape = 'u8[262144]{0}', space=vmem, size = 0x40000, scoped, tag = 'input window, operand 3, single buffered']
    #allocation9 [shape = 's32[1]{0}', space=sflag, size = 0x4, scoped, tag = 'scoped memory for tpu_custom_call.1']
    #allocation10 [shape = 'u8[16384]{0}', space=vmem, size = 0x4000, scoped, tag = 'output window, operand 0, single buffered']
    %9 = vsyncpa [#allocation3], 0
    %10 = vsyncpa [#allocation6], 0
    %11 = vsyncpa [#allocation9], 0
    %12 = vsyncpa [#allocation4], 0
    // Predicated region
    $region2: #{tpu_custom_call.1} parent=1 // pred_check
      _
    $region3: #{tpu_custom_call.1} parent=1 // pred_check_branch
      %14 = sbr.rel (0) target = $region5
    $region4: #{tpu_custom_call.1} parent=1 // pred_region
      %s16 = ssub.s32 512, 512
      %17 = vsyncadd [#allocation3], %s16
      %s19 = sshll.u32 [#allocation2], 4
      %s20 = int_to_ptr.vmem [resolvable:$true] %s19
      %22 = dma.hbm_to_vmem [thread:$0]  %s0, 512, %s20, [#allocation3]
    $region5: #{tpu_custom_call.1} parent=1 // pred_fallthru
      _
    // Predicated region
    $region6: #{tpu_custom_call.1} parent=1 // pred_check
      _
    $region7: #{tpu_custom_call.1} parent=1 // pred_check_branch
      %24 = sbr.rel (0) target = $region9
    $region8: #{tpu_custom_call.1} parent=1 // pred_region
      %s26 = ssub.s32 8192, 8192
      %27 = vsyncadd [#allocation6], %s26
      %s28 = sshll.u32 [#allocation5], 4
      %s29 = int_to_ptr.vmem [resolvable:$true] %s28
      %34 = dma.hbm_to_vmem [thread:$0]  %s1, 8192, %s29, [#allocation6], 128, 128, 8
    $region9: #{tpu_custom_call.1} parent=1 // pred_fallthru
      _
    // Predicated region
    $region10: #{tpu_custom_call.1} parent=1 // pred_check
      _
    $region11: #{tpu_custom_call.1} parent=1 // pred_check_branch
      %36 = sbr.rel (0) target = $region13
    $region12: #{tpu_custom_call.1} parent=1 // pred_region
      %s38 = ssub.s32 14336, 14336
      %39 = vsyncadd [#allocation6], %s38
      %s40 = sshll.u32 [#allocation7], 4
      %s41 = int_to_ptr.vmem [resolvable:$true] %s40
      %46 = dma.hbm_to_vmem [thread:$0]  %s2, 14336, %s41, [#allocation6], 128, 128, 8
    $region13: #{tpu_custom_call.1} parent=1 // pred_fallthru
      _
    // Predicated region
    $region14: #{tpu_custom_call.1} parent=1 // pred_check
      _
    $region15: #{tpu_custom_call.1} parent=1 // pred_check_branch
      %48 = sbr.rel (0) target = $region17
    $region16: #{tpu_custom_call.1} parent=1 // pred_region
      %s50 = ssub.s32 8192, 8192
      %51 = vsyncadd [#allocation9], %s50
      %s52 = sshll.u32 [#allocation8], 4
      %s53 = int_to_ptr.vmem [resolvable:$true] %s52
      %58 = dma.hbm_to_vmem [thread:$0]  %s3, 8192, %s53, [#allocation9], 512, 512, 32
    $region17: #{tpu_custom_call.1} parent=1 // pred_fallthru
      _
    // Predicated region
    $region18: #{tpu_custom_call.1} parent=1 // pred_check
      _
    $region19: #{tpu_custom_call.1} parent=1 // pred_check_branch
      %60 = sbr.rel (0) target = $region21
    $region20: #{tpu_custom_call.1} parent=1 // pred_region
      %61 = dma.done [#allocation3], 512
    $region21: #{tpu_custom_call.1} parent=1 // pred_fallthru
      _
    // Predicated region
    $region22: #{tpu_custom_call.1} parent=1 // pred_check
      _
    $region23: #{tpu_custom_call.1} parent=1 // pred_check_branch
      %63 = sbr.rel (0) target = $region25
    $region24: #{tpu_custom_call.1} parent=1 // pred_region
      %64 = dma.done [#allocation6], 8192
    $region25: #{tpu_custom_call.1} parent=1 // pred_fallthru
      _
    // Predicated region
    $region26: #{tpu_custom_call.1} parent=1 // pred_check
      _
    $region27: #{tpu_custom_call.1} parent=1 // pred_check_branch
      %66 = sbr.rel (0) target = $region29
    $region28: #{tpu_custom_call.1} parent=1 // pred_region
      %67 = dma.done [#allocation6], 14336
    $region29: #{tpu_custom_call.1} parent=1 // pred_fallthru
      _
    // Predicated region
    $region30: #{tpu_custom_call.1} parent=1 // pred_check
      _
    $region31: #{tpu_custom_call.1} parent=1 // pred_check_branch
      %69 = sbr.rel (0) target = $region33
    $region32: #{tpu_custom_call.1} parent=1 // pred_region
      %70 = dma.done [#allocation9], 8192
    $region33: #{tpu_custom_call.1} parent=1 // pred_fallthru
      _
    %v71 = vld [vmem:[#allocation2] sm:$0xff]
    %v72 = vld [vmem:[#allocation2 + $0x8] sm:$0xff]
    %v73 = vld [vmem:[#allocation2 + $0x10] sm:$0xff]
    %v74 = vld [vmem:[#allocation2 + $0x18] sm:$0xff]
    %v75 = vld [vmem:[#allocation5] sm:$0xff]
    %v76 = vld [vmem:[#allocation5 + $0x8] sm:$0xff]
    %v77 = vld [vmem:[#allocation5 + $0x10] sm:$0xff]
    %v78 = vld [vmem:[#allocation5 + $0x18] sm:$0xff]
    %v79 = vld [vmem:[#allocation5 + $0x20] sm:$0xff]
    %v80 = vld [vmem:[#allocation5 + $0x28] sm:$0xff]
    %v81 = vld [vmem:[#allocation5 + $0x30] sm:$0xff]
    %v82 = vld [vmem:[#allocation5 + $0x38] sm:$0xff]
    %v83 = vld [vmem:[#allocation5 + $0x40] sm:$0xff]
    %v84 = vld [vmem:[#allocation5 + $0x48] sm:$0xff]
    %v85 = vld [vmem:[#allocation5 + $0x50] sm:$0xff]
    %v86 = vld [vmem:[#allocation5 + $0x58] sm:$0xff]
    %v87 = vld [vmem:[#allocation5 + $0x60] sm:$0xff]
    %v88 = vld [vmem:[#allocation5 + $0x68] sm:$0xff]
    %v89 = vld [vmem:[#allocation5 + $0x70] sm:$0xff]
    %v90 = vld [vmem:[#allocation5 + $0x78] sm:$0xff]
    %v91 = vld [vmem:[#allocation5 + $0x80] sm:$0xff]
    %v92 = vld [vmem:[#allocation5 + $0x88] sm:$0xff]
    %v93 = vld [vmem:[#allocation5 + $0x90] sm:$0xff]
    %v94 = vld [vmem:[#allocation5 + $0x98] sm:$0xff]
    %v95 = vld [vmem:[#allocation5 + $0xa0] sm:$0xff]
    %v96 = vld [vmem:[#allocation5 + $0xa8] sm:$0xff]
    %v97 = vld [vmem:[#allocation5 + $0xb0] sm:$0xff]
    %v98 = vld [vmem:[#allocation5 + $0xb8] sm:$0xff]
    %v99 = vld [vmem:[#allocation5 + $0xc0] sm:$0xff]
    %v100 = vld [vmem:[#allocation5 + $0xc8] sm:$0xff]
    %v101 = vld [vmem:[#allocation5 + $0xd0] sm:$0xff]
    %v102 = vld [vmem:[#allocation5 + $0xd8] sm:$0xff]
    %v103 = vld [vmem:[#allocation5 + $0xe0] sm:$0xff]
    %v104 = vld [vmem:[#allocation5 + $0xe8] sm:$0xff]
    %v105 = vld [vmem:[#allocation5 + $0xf0] sm:$0xff]
    %v106 = vld [vmem:[#allocation5 + $0xf8] sm:$0xff]
    %v107 = vld [vmem:[#allocation5 + $0x100] sm:$0xff]
    %v108 = vld [vmem:[#allocation5 + $0x108] sm:$0xff]
    %v109 = vld [vmem:[#allocation5 + $0x110] sm:$0xff]
    %v110 = vld [vmem:[#allocation5 + $0x118] sm:$0xff]
    %v111 = vld [vmem:[#allocation5 + $0x120] sm:$0xff]
    %v112 = vld [vmem:[#allocation5 + $0x128] sm:$0xff]
    %v113 = vld [vmem:[#allocation5 + $0x130] sm:$0xff]
    %v114 = vld [vmem:[#allocation5 + $0x138] sm:$0xff]
    %v115 = vld [vmem:[#allocation5 + $0x140] sm:$0xff]
    %v116 = vld [vmem:[#allocation5 + $0x148] sm:$0xff]
    %v117 = vld [vmem:[#allocation5 + $0x150] sm:$0xff]
    %v118 = vld [vmem:[#allocation5 + $0x158] sm:$0xff]
    %v119 = vld [vmem:[#allocation5 + $0x160] sm:$0xff]
    %v120 = vld [vmem:[#allocation5 + $0x168] sm:$0xff]
    %v121 = vld [vmem:[#allocation5 + $0x170] sm:$0xff]
    %v122 = vld [vmem:[#allocation5 + $0x178] sm:$0xff]
    %v123 = vld [vmem:[#allocation5 + $0x180] sm:$0xff]
    %v124 = vld [vmem:[#allocation5 + $0x188] sm:$0xff]
    %v125 = vld [vmem:[#allocation5 + $0x190] sm:$0xff]
    %v126 = vld [vmem:[#allocation5 + $0x198] sm:$0xff]
    %v127 = vld [vmem:[#allocation5 + $0x1a0] sm:$0xff]
    %v128 = vld [vmem:[#allocation5 + $0x1a8] sm:$0xff]
    %v129 = vld [vmem:[#allocation5 + $0x1b0] sm:$0xff]
    %v130 = vld [vmem:[#allocation5 + $0x1b8] sm:$0xff]
    %v131 = vld [vmem:[#allocation5 + $0x1c0] sm:$0xff]
    %v132 = vld [vmem:[#allocation5 + $0x1c8] sm:$0xff]
    %v133 = vld [vmem:[#allocation5 + $0x1d0] sm:$0xff]
    %v134 = vld [vmem:[#allocation5 + $0x1d8] sm:$0xff]
    %v135 = vld [vmem:[#allocation5 + $0x1e0] sm:$0xff]
    %v136 = vld [vmem:[#allocation5 + $0x1e8] sm:$0xff]
    %v137 = vld [vmem:[#allocation5 + $0x1f0] sm:$0xff]
    %v138 = vld [vmem:[#allocation5 + $0x1f8] sm:$0xff]
    %139 = vmatprep.subr.mxu0 0.0
    %140 = vmatpush1.msra.mxu0 %v75
    %141 = vmatprep.subr.mxu0 0.0
    %142 = vmatpush1.msra.mxu0 %v76
    %143 = vmatprep.subr.mxu0 0.0
    %144 = vmatpush1.msra.mxu0 %v77
    %145 = vmatprep.subr.mxu0 0.0
    %146 = vmatpush1.msra.mxu0 %v78
    %147 = vmatprep.subr.mxu0 0.0
    %148 = vmatpush1.msra.mxu0 %v79
    %149 = vmatprep.subr.mxu0 0.0
    %150 = vmatpush1.msra.mxu0 %v80
    %151 = vmatprep.subr.mxu0 0.0
    %152 = vmatpush1.msra.mxu0 %v81
    %153 = vmatprep.subr.mxu0 0.0
    %154 = vmatpush1.msra.mxu0 %v82
    %155 = vmatprep.subr.mxu0 0.0
    %156 = vmatpush1.msra.mxu0 %v83
    %157 = vmatprep.subr.mxu0 0.0
    %158 = vmatpush1.msra.mxu0 %v84
    %159 = vmatprep.subr.mxu0 0.0
    %160 = vmatpush1.msra.mxu0 %v85
    %161 = vmatprep.subr.mxu0 0.0
    %162 = vmatpush1.msra.mxu0 %v86
    %163 = vmatprep.subr.mxu0 0.0
    %164 = vmatpush1.msra.mxu0 %v87
    %165 = vmatprep.subr.mxu0 0.0
    %166 = vmatpush1.msra.mxu0 %v88
    %167 = vmatprep.subr.mxu0 0.0
    %168 = vmatpush1.msra.mxu0 %v89
    %169 = vmatprep.subr.mxu0 0.0
    %170 = vmatpush1.msra.mxu0 %v90
    %171 = vmatprep.subr.mxu0 0.0
    %172 = vmatpush1.msra.mxu0 %v91
    %173 = vmatprep.subr.mxu0 0.0
    %174 = vmatpush1.msra.mxu0 %v92
    %175 = vmatprep.subr.mxu0 0.0
    %176 = vmatpush1.msra.mxu0 %v93
    %177 = vmatprep.subr.mxu0 0.0
    %178 = vmatpush1.msra.mxu0 %v94
    %179 = vmatprep.subr.mxu0 0.0
    %180 = vmatpush1.msra.mxu0 %v95
    %181 = vmatprep.subr.mxu0 0.0
    %182 = vmatpush1.msra.mxu0 %v96
    %183 = vmatprep.subr.mxu0 0.0
    %184 = vmatpush1.msra.mxu0 %v97
    %185 = vmatprep.subr.mxu0 0.0
    %186 = vmatpush1.msra.mxu0 %v98
    %187 = vmatprep.subr.mxu0 0.0
    %188 = vmatpush1.msra.mxu0 %v99
    %189 = vmatprep.subr.mxu0 0.0
    %190 = vmatpush1.msra.mxu0 %v100
    %191 = vmatprep.subr.mxu0 0.0
    %192 = vmatpush1.msra.mxu0 %v101
    %193 = vmatprep.subr.mxu0 0.0
    %194 = vmatpush1.msra.mxu0 %v102
    %195 = vmatprep.subr.mxu0 0.0
    %196 = vmatpush1.msra.mxu0 %v103
    %197 = vmatprep.subr.mxu0 0.0
    %198 = vmatpush1.msra.mxu0 %v104
    %199 = vmatprep.subr.mxu0 0.0
    %200 = vmatpush1.msra.mxu0 %v105
    %201 = vmatprep.subr.mxu0 0.0
    %202 = vmatpush1.msra.mxu0 %v106
    %203 = vmatprep.mubr.f32.mxu0 %v72
    %204 = vmatmul.mubr.f32.gmra.mrb[0].mxu0 %v71
    %v205 = vpop.f32.mrb[0].mxu0
    %v206 = vadd.f32 0.0, %v205
    %v207 = vpop.f32.mrb[0].mxu0
    %208 = vdwg.mxu0
    %209 = vmatprep.subr.mxu0 0.0
    %210 = vmatpush1.msra.mxu0 %v107
    %211 = vmatprep.subr.mxu0 0.0
    %212 = vmatpush1.msra.mxu0 %v108
    %213 = vmatprep.subr.mxu0 0.0
    %214 = vmatpush1.msra.mxu0 %v109
    %215 = vmatprep.subr.mxu0 0.0
    %216 = vmatpush1.msra.mxu0 %v110
    %217 = vmatprep.subr.mxu0 0.0
    %218 = vmatpush1.msra.mxu0 %v111
    %219 = vmatprep.subr.mxu0 0.0
    %220 = vmatpush1.msra.mxu0 %v112
    %221 = vmatprep.subr.mxu0 0.0
    %222 = vmatpush1.msra.mxu0 %v113
    %223 = vmatprep.subr.mxu0 0.0
    %224 = vmatpush1.msra.mxu0 %v114
    %225 = vmatprep.subr.mxu0 0.0
    %226 = vmatpush1.msra.mxu0 %v115
    %227 = vmatprep.subr.mxu0 0.0
    %228 = vmatpush1.msra.mxu0 %v116
    %229 = vmatprep.subr.mxu0 0.0
    %230 = vmatpush1.msra.mxu0 %v117
    %231 = vmatprep.subr.mxu0 0.0
    %232 = vmatpush1.msra.mxu0 %v118
    %233 = vmatprep.subr.mxu0 0.0
    %234 = vmatpush1.msra.mxu0 %v119
    %235 = vmatprep.subr.mxu0 0.0
    %236 = vmatpush1.msra.mxu0 %v120
    %237 = vmatprep.subr.mxu0 0.0
    %238 = vmatpush1.msra.mxu0 %v121
    %239 = vmatprep.subr.mxu0 0.0
    %240 = vmatpush1.msra.mxu0 %v122
    %241 = vmatprep.subr.mxu0 0.0
    %242 = vmatpush1.msra.mxu0 %v123
    %243 = vmatprep.subr.mxu0 0.0
    %244 = vmatpush1.msra.mxu0 %v124
    %245 = vmatprep.subr.mxu0 0.0
    %246 = vmatpush1.msra.mxu0 %v125
    %247 = vmatprep.subr.mxu0 0.0
    %248 = vmatpush1.msra.mxu0 %v126
    %249 = vmatprep.subr.mxu0 0.0
    %250 = vmatpush1.msra.mxu0 %v127
    %251 = vmatprep.subr.mxu0 0.0
    %252 = vmatpush1.msra.mxu0 %v128
    %253 = vmatprep.subr.mxu0 0.0
    %254 = vmatpush1.msra.mxu0 %v129
    %255 = vmatprep.subr.mxu0 0.0
    %256 = vmatpush1.msra.mxu0 %v130
    %257 = vmatprep.subr.mxu0 0.0
    %258 = vmatpush1.msra.mxu0 %v131
    %259 = vmatprep.subr.mxu0 0.0
    %260 = vmatpush1.msra.mxu0 %v132
    %261 = vmatprep.subr.mxu0 0.0
    %262 = vmatpush1.msra.mxu0 %v133
    %263 = vmatprep.subr.mxu0 0.0
    %264 = vmatpush1.msra.mxu0 %v134
    %265 = vmatprep.subr.mxu0 0.0
    %266 = vmatpush1.msra.mxu0 %v135
    %267 = vmatprep.subr.mxu0 0.0
    %268 = vmatpush1.msra.mxu0 %v136
    %269 = vmatprep.subr.mxu0 0.0
    %270 = vmatpush1.msra.mxu0 %v137
    %271 = vmatprep.subr.mxu0 0.0
    %272 = vmatpush1.msra.mxu0 %v138
    %273 = vmatprep.mubr.f32.mxu0 %v74
    %274 = vmatmul.mubr.f32.gmra.mrb[0].mxu0 %v73
    %v275 = vpop.f32.mrb[0].mxu0
    %v276 = vadd.f32 %v206, %v275
    %v277 = vpop.f32.mrb[0].mxu0
    %278 = vdwg.mxu0
    %v279 = vmul.f32 %v276, 0.5
    %v280 = vmul.f32 %v276, 0.70710677
    %v281 = verf.f32.pop %v280
    %v282 = vadd.f32 %v281, 1.0
    %v283 = vmul.f32 %v279, %v282
    %v284 = vld [vmem:[#allocation7] sm:$0xff]
    %v285 = vld [vmem:[#allocation7 + $0x8] sm:$0xff]
    %v286 = vld [vmem:[#allocation7 + $0x10] sm:$0xff]
    %v287 = vld [vmem:[#allocation7 + $0x18] sm:$0xff]
    %v288 = vld [vmem:[#allocation7 + $0x20] sm:$0xff]
    %v289 = vld [vmem:[#allocation7 + $0x28] sm:$0xff]
    %v290 = vld [vmem:[#allocation7 + $0x30] sm:$0xff]
    %v291 = vld [vmem:[#allocation7 + $0x38] sm:$0xff]
    %v292 = vld [vmem:[#allocation7 + $0x40] sm:$0xff]
    %v293 = vld [vmem:[#allocation7 + $0x48] sm:$0xff]
    %v294 = vld [vmem:[#allocation7 + $0x50] sm:$0xff]
    %v295 = vld [vmem:[#allocation7 + $0x58] sm:$0xff]
    %v296 = vld [vmem:[#allocation7 + $0x60] sm:$0xff]
    %v297 = vld [vmem:[#allocation7 + $0x68] sm:$0xff]
    %v298 = vld [vmem:[#allocation7 + $0x70] sm:$0xff]
    %v299 = vld [vmem:[#allocation7 + $0x78] sm:$0xff]
    %300 = vmatprep.subr.mxu0 0.0
    %301 = vmatpush1.msra.mxu0 %v284
    %302 = vmatprep.subr.mxu0 0.0
    %303 = vmatpush1.msra.mxu0 %v285
    %304 = vmatprep.subr.mxu0 0.0
    %305 = vmatpush1.msra.mxu0 %v286
    %306 = vmatprep.subr.mxu0 0.0
    %307 = vmatpush1.msra.mxu0 %v287
    %308 = vmatprep.subr.mxu0 0.0
    %309 = vmatpush1.msra.mxu0 %v288
    %310 = vmatprep.subr.mxu0 0.0
    %311 = vmatpush1.msra.mxu0 %v289
    %312 = vmatprep.subr.mxu0 0.0
    %313 = vmatpush1.msra.mxu0 %v290
    %314 = vmatprep.subr.mxu0 0.0
    %315 = vmatpush1.msra.mxu0 %v291
    %316 = vmatprep.subr.mxu0 0.0
    %317 = vmatpush1.msra.mxu0 %v292
    %318 = vmatprep.subr.mxu0 0.0
    %319 = vmatpush1.msra.mxu0 %v293
    %320 = vmatprep.subr.mxu0 0.0
    %321 = vmatpush1.msra.mxu0 %v294
    %322 = vmatprep.subr.mxu0 0.0
    %323 = vmatpush1.msra.mxu0 %v295
    %324 = vmatprep.subr.mxu0 0.0
    %325 = vmatpush1.msra.mxu0 %v296
    %326 = vmatprep.subr.mxu0 0.0
    %327 = vmatpush1.msra.mxu0 %v297
    %328 = vmatprep.subr.mxu0 0.0
    %329 = vmatpush1.msra.mxu0 %v298
    %330 = vmatprep.subr.mxu0 0.0
    %331 = vmatpush1.msra.mxu0 %v299
    %332 = vmatprep.subr.mxu0 0.0
    %333 = vmatpush1.msra.mxu0 0.0
    %334 = vmatprep.subr.mxu0 0.0
    %335 = vmatpush1.msra.mxu0 0.0
    %336 = vmatprep.subr.mxu0 0.0
    %337 = vmatpush1.msra.mxu0 0.0
    %338 = vmatprep.subr.mxu0 0.0
    %339 = vmatpush1.msra.mxu0 0.0
    %340 = vmatprep.subr.mxu0 0.0
    %341 = vmatpush1.msra.mxu0 0.0
    %342 = vmatprep.subr.mxu0 0.0
    %343 = vmatpush1.msra.mxu0 0.0
    %344 = vmatprep.subr.mxu0 0.0
    %345 = vmatpush1.msra.mxu0 0.0
    %346 = vmatprep.subr.mxu0 0.0
    %347 = vmatpush1.msra.mxu0 0.0
    %348 = vmatprep.subr.mxu0 0.0
    %349 = vmatpush1.msra.mxu0 0.0
    %350 = vmatprep.subr.mxu0 0.0
    %351 = vmatpush1.msra.mxu0 0.0
    %352 = vmatprep.subr.mxu0 0.0
    %353 = vmatpush1.msra.mxu0 0.0
    %354 = vmatprep.subr.mxu0 0.0
    %355 = vmatpush1.msra.mxu0 0.0
    %356 = vmatprep.subr.mxu0 0.0
    %357 = vmatpush1.msra.mxu0 0.0
    %358 = vmatprep.subr.mxu0 0.0
    %359 = vmatpush1.msra.mxu0 0.0
    %360 = vmatprep.subr.mxu0 0.0
    %361 = vmatpush1.msra.mxu0 0.0
    %362 = vmatprep.subr.mxu0 0.0
    %363 = vmatpush1.msra.mxu0 0.0
    %364 = vmatprep.mubr.f32.mxu0 0.0
    %365 = vmatmul.mubr.f32.gmra.mrb[0].mxu0 %v283
    %v366 = vpop.f32.mrb[0].mxu0
    %v367 = vadd.f32 0.0, %v366
    %v368 = vpop.f32.mrb[0].mxu0
    %369 = vdwg.mxu0
    %v370 = vmul.f32 %v367, 0.5
    %v371 = vmul.f32 %v367, 0.70710677
    %v372 = verf.f32.pop %v371
    %v373 = vadd.f32 %v372, 1.0
    %v374 = vmul.f32 %v370, %v373
    %s375 = scalar_lea.vmem [#allocation7], 128
    %v376 = vld [vmem:[%s375] sm:$0xff]
    %v377 = vld [vmem:[%s375 + $0x8] sm:$0xff]
    %v378 = vld [vmem:[%s375 + $0x10] sm:$0xff]
    %v379 = vld [vmem:[%s375 + $0x18] sm:$0xff]
    %v380 = vld [vmem:[%s375 + $0x20] sm:$0xff]
    %v381 = vld [vmem:[%s375 + $0x28] sm:$0xff]
    %v382 = vld [vmem:[%s375 + $0x30] sm:$0xff]
    %v383 = vld [vmem:[%s375 + $0x38] sm:$0xff]
    %v384 = vld [vmem:[%s375 + $0x40] sm:$0xff]
    %v385 = vld [vmem:[%s375 + $0x48] sm:$0xff]
    %v386 = vld [vmem:[%s375 + $0x50] sm:$0xff]
    %v387 = vld [vmem:[%s375 + $0x58] sm:$0xff]
    %v388 = vld [vmem:[%s375 + $0x60] sm:$0xff]
    %v389 = vld [vmem:[%s375 + $0x68] sm:$0xff]
    %v390 = vld [vmem:[%s375 + $0x70] sm:$0xff]
    %v391 = vld [vmem:[%s375 + $0x78] sm:$0xff]
    %392 = vmatprep.subr.mxu0 0.0
    %393 = vmatpush1.msra.mxu0 %v376
    %394 = vmatprep.subr.mxu0 0.0
    %395 = vmatpush1.msra.mxu0 %v377
    %396 = vmatprep.subr.mxu0 0.0
    %397 = vmatpush1.msra.mxu0 %v378
    %398 = vmatprep.subr.mxu0 0.0
    %399 = vmatpush1.msra.mxu0 %v379
    %400 = vmatprep.subr.mxu0 0.0
    %401 = vmatpush1.msra.mxu0 %v380
    %402 = vmatprep.subr.mxu0 0.0
    %403 = vmatpush1.msra.mxu0 %v381
    %404 = vmatprep.subr.mxu0 0.0
    %405 = vmatpush1.msra.mxu0 %v382
    %406 = vmatprep.subr.mxu0 0.0
    %407 = vmatpush1.msra.mxu0 %v383
    %408 = vmatprep.subr.mxu0 0.0
    %409 = vmatpush1.msra.mxu0 %v384
    %410 = vmatprep.subr.mxu0 0.0
    %411 = vmatpush1.msra.mxu0 %v385
    %412 = vmatprep.subr.mxu0 0.0
    %413 = vmatpush1.msra.mxu0 %v386
    %414 = vmatprep.subr.mxu0 0.0
    %415 = vmatpush1.msra.mxu0 %v387
    %416 = vmatprep.subr.mxu0 0.0
    %417 = vmatpush1.msra.mxu0 %v388
    %418 = vmatprep.subr.mxu0 0.0
    %419 = vmatpush1.msra.mxu0 %v389
    %420 = vmatprep.subr.mxu0 0.0
    %421 = vmatpush1.msra.mxu0 %v390
    %422 = vmatprep.subr.mxu0 0.0
    %423 = vmatpush1.msra.mxu0 %v391
    %424 = vmatprep.subr.mxu0 0.0
    %425 = vmatpush1.msra.mxu0 0.0
    %426 = vmatprep.subr.mxu0 0.0
    %427 = vmatpush1.msra.mxu0 0.0
    %428 = vmatprep.subr.mxu0 0.0
    %429 = vmatpush1.msra.mxu0 0.0
    %430 = vmatprep.subr.mxu0 0.0
    %431 = vmatpush1.msra.mxu0 0.0
    %432 = vmatprep.subr.mxu0 0.0
    %433 = vmatpush1.msra.mxu0 0.0
    %434 = vmatprep.subr.mxu0 0.0
    %435 = vmatpush1.msra.mxu0 0.0
    %436 = vmatprep.subr.mxu0 0.0
    %437 = vmatpush1.msra.mxu0 0.0
    %438 = vmatprep.subr.mxu0 0.0
    %439 = vmatpush1.msra.mxu0 0.0
    %440 = vmatprep.subr.mxu0 0.0
    %441 = vmatpush1.msra.mxu0 0.0
    %442 = vmatprep.subr.mxu0 0.0
    %443 = vmatpush1.msra.mxu0 0.0
    %444 = vmatprep.subr.mxu0 0.0
    %445 = vmatpush1.msra.mxu0 0.0
    %446 = vmatprep.subr.mxu0 0.0
    %447 = vmatpush1.msra.mxu0 0.0
    %448 = vmatprep.subr.mxu0 0.0
    %449 = vmatpush1.msra.mxu0 0.0
    %450 = vmatprep.subr.mxu0 0.0
    %451 = vmatpush1.msra.mxu0 0.0
    %452 = vmatprep.subr.mxu0 0.0
    %453 = vmatpush1.msra.mxu0 0.0
    %454 = vmatprep.subr.mxu0 0.0
    %455 = vmatpush1.msra.mxu0 0.0
    %456 = vmatprep.mubr.f32.mxu0 0.0
    %457 = vmatmul.mubr.f32.gmra.mrb[0].mxu0 %v374
    %v458 = vpop.f32.mrb[0].mxu0
    %v459 = vadd.f32 0.0, %v458
    %v460 = vpop.f32.mrb[0].mxu0
    %461 = vdwg.mxu0
    %v462 = vmul.f32 %v459, 0.5
    %v463 = vmul.f32 %v459, 0.70710677
    %v464 = verf.f32.pop %v463
    %v465 = vadd.f32 %v464, 1.0
    %v466 = vmul.f32 %v462, %v465
    %s467 = scalar_lea.vmem [#allocation7], 256
    %v468 = vld [vmem:[%s467] sm:$0xff]
    %v469 = vld [vmem:[%s467 + $0x8] sm:$0xff]
    %v470 = vld [vmem:[%s467 + $0x10] sm:$0xff]
    %v471 = vld [vmem:[%s467 + $0x18] sm:$0xff]
    %v472 = vld [vmem:[%s467 + $0x20] sm:$0xff]
    %v473 = vld [vmem:[%s467 + $0x28] sm:$0xff]
    %v474 = vld [vmem:[%s467 + $0x30] sm:$0xff]
    %v475 = vld [vmem:[%s467 + $0x38] sm:$0xff]
    %v476 = vld [vmem:[%s467 + $0x40] sm:$0xff]
    %v477 = vld [vmem:[%s467 + $0x48] sm:$0xff]
    %v478 = vld [vmem:[%s467 + $0x50] sm:$0xff]
    %v479 = vld [vmem:[%s467 + $0x58] sm:$0xff]
    %v480 = vld [vmem:[%s467 + $0x60] sm:$0xff]
    %v481 = vld [vmem:[%s467 + $0x68] sm:$0xff]
    %v482 = vld [vmem:[%s467 + $0x70] sm:$0xff]
    %v483 = vld [vmem:[%s467 + $0x78] sm:$0xff]
    %484 = vmatprep.subr.mxu0 0.0
    %485 = vmatpush1.msra.mxu0 %v468
    %486 = vmatprep.subr.mxu0 0.0
    %487 = vmatpush1.msra.mxu0 %v469
    %488 = vmatprep.subr.mxu0 0.0
    %489 = vmatpush1.msra.mxu0 %v470
    %490 = vmatprep.subr.mxu0 0.0
    %491 = vmatpush1.msra.mxu0 %v471
    %492 = vmatprep.subr.mxu0 0.0
    %493 = vmatpush1.msra.mxu0 %v472
    %494 = vmatprep.subr.mxu0 0.0
    %495 = vmatpush1.msra.mxu0 %v473
    %496 = vmatprep.subr.mxu0 0.0
    %497 = vmatpush1.msra.mxu0 %v474
    %498 = vmatprep.subr.mxu0 0.0
    %499 = vmatpush1.msra.mxu0 %v475
    %500 = vmatprep.subr.mxu0 0.0
    %501 = vmatpush1.msra.mxu0 %v476
    %502 = vmatprep.subr.mxu0 0.0
    %503 = vmatpush1.msra.mxu0 %v477
    %504 = vmatprep.subr.mxu0 0.0
    %505 = vmatpush1.msra.mxu0 %v478
    %506 = vmatprep.subr.mxu0 0.0
    %507 = vmatpush1.msra.mxu0 %v479
    %508 = vmatprep.subr.mxu0 0.0
    %509 = vmatpush1.msra.mxu0 %v480
    %510 = vmatprep.subr.mxu0 0.0
    %511 = vmatpush1.msra.mxu0 %v481
    %512 = vmatprep.subr.mxu0 0.0
    %513 = vmatpush1.msra.mxu0 %v482
    %514 = vmatprep.subr.mxu0 0.0
    %515 = vmatpush1.msra.mxu0 %v483
    %516 = vmatprep.subr.mxu0 0.0
    %517 = vmatpush1.msra.mxu0 0.0
    %518 = vmatprep.subr.mxu0 0.0
    %519 = vmatpush1.msra.mxu0 0.0
    %520 = vmatprep.subr.mxu0 0.0
    %521 = vmatpush1.msra.mxu0 0.0
    %522 = vmatprep.subr.mxu0 0.0
    %523 = vmatpush1.msra.mxu0 0.0
    %524 = vmatprep.subr.mxu0 0.0
    %525 = vmatpush1.msra.mxu0 0.0
    %526 = vmatprep.subr.mxu0 0.0
    %527 = vmatpush1.msra.mxu0 0.0
    %528 = vmatprep.subr.mxu0 0.0
    %529 = vmatpush1.msra.mxu0 0.0
    %530 = vmatprep.subr.mxu0 0.0
    %531 = vmatpush1.msra.mxu0 0.0
    %532 = vmatprep.subr.mxu0 0.0
    %533 = vmatpush1.msra.mxu0 0.0
    %534 = vmatprep.subr.mxu0 0.0
    %535 = vmatpush1.msra.mxu0 0.0
    %536 = vmatprep.subr.mxu0 0.0
    %537 = vmatpush1.msra.mxu0 0.0
    %538 = vmatprep.subr.mxu0 0.0
    %539 = vmatpush1.msra.mxu0 0.0
    %540 = vmatprep.subr.mxu0 0.0
    %541 = vmatpush1.msra.mxu0 0.0
    %542 = vmatprep.subr.mxu0 0.0
    %543 = vmatpush1.msra.mxu0 0.0
    %544 = vmatprep.subr.mxu0 0.0
    %545 = vmatpush1.msra.mxu0 0.0
    %546 = vmatprep.subr.mxu0 0.0
    %547 = vmatpush1.msra.mxu0 0.0
    %548 = vmatprep.mubr.f32.mxu0 0.0
    %549 = vmatmul.mubr.f32.gmra.mrb[0].mxu0 %v466
    %v550 = vpop.f32.mrb[0].mxu0
    %v551 = vadd.f32 0.0, %v550
    %v552 = vpop.f32.mrb[0].mxu0
    %553 = vdwg.mxu0
    %v554 = vmul.f32 %v551, 0.5
    %v555 = vmul.f32 %v551, 0.70710677
    %v556 = verf.f32.pop %v555
    %v557 = vadd.f32 %v556, 1.0
    %v558 = vmul.f32 %v554, %v557
    %s559 = scalar_lea.vmem [#allocation7], 384
    %v560 = vld [vmem:[%s559] sm:$0xff]
    %v561 = vld [vmem:[%s559 + $0x8] sm:$0xff]
    %v562 = vld [vmem:[%s559 + $0x10] sm:$0xff]
    %v563 = vld [vmem:[%s559 + $0x18] sm:$0xff]
    %v564 = vld [vmem:[%s559 + $0x20] sm:$0xff]
    %v565 = vld [vmem:[%s559 + $0x28] sm:$0xff]
    %v566 = vld [vmem:[%s559 + $0x30] sm:$0xff]
    %v567 = vld [vmem:[%s559 + $0x38] sm:$0xff]
    %v568 = vld [vmem:[%s559 + $0x40] sm:$0xff]
    %v569 = vld [vmem:[%s559 + $0x48] sm:$0xff]
    %v570 = vld [vmem:[%s559 + $0x50] sm:$0xff]
    %v571 = vld [vmem:[%s559 + $0x58] sm:$0xff]
    %v572 = vld [vmem:[%s559 + $0x60] sm:$0xff]
    %v573 = vld [vmem:[%s559 + $0x68] sm:$0xff]
    %v574 = vld [vmem:[%s559 + $0x70] sm:$0xff]
    %v575 = vld [vmem:[%s559 + $0x78] sm:$0xff]
    %576 = vmatprep.subr.mxu0 0.0
    %577 = vmatpush1.msra.mxu0 %v560
    %578 = vmatprep.subr.mxu0 0.0
    %579 = vmatpush1.msra.mxu0 %v561
    %580 = vmatprep.subr.mxu0 0.0
    %581 = vmatpush1.msra.mxu0 %v562
    %582 = vmatprep.subr.mxu0 0.0
    %583 = vmatpush1.msra.mxu0 %v563
    %584 = vmatprep.subr.mxu0 0.0
    %585 = vmatpush1.msra.mxu0 %v564
    %586 = vmatprep.subr.mxu0 0.0
    %587 = vmatpush1.msra.mxu0 %v565
    %588 = vmatprep.subr.mxu0 0.0
    %589 = vmatpush1.msra.mxu0 %v566
    %590 = vmatprep.subr.mxu0 0.0
    %591 = vmatpush1.msra.mxu0 %v567
    %592 = vmatprep.subr.mxu0 0.0
    %593 = vmatpush1.msra.mxu0 %v568
    %594 = vmatprep.subr.mxu0 0.0
    %595 = vmatpush1.msra.mxu0 %v569
    %596 = vmatprep.subr.mxu0 0.0
    %597 = vmatpush1.msra.mxu0 %v570
    %598 = vmatprep.subr.mxu0 0.0
    %599 = vmatpush1.msra.mxu0 %v571
    %600 = vmatprep.subr.mxu0 0.0
    %601 = vmatpush1.msra.mxu0 %v572
    %602 = vmatprep.subr.mxu0 0.0
    %603 = vmatpush1.msra.mxu0 %v573
    %604 = vmatprep.subr.mxu0 0.0
    %605 = vmatpush1.msra.mxu0 %v574
    %606 = vmatprep.subr.mxu0 0.0
    %607 = vmatpush1.msra.mxu0 %v575
    %608 = vmatprep.subr.mxu0 0.0
    %609 = vmatpush1.msra.mxu0 0.0
    %610 = vmatprep.subr.mxu0 0.0
    %611 = vmatpush1.msra.mxu0 0.0
    %612 = vmatprep.subr.mxu0 0.0
    %613 = vmatpush1.msra.mxu0 0.0
    %614 = vmatprep.subr.mxu0 0.0
    %615 = vmatpush1.msra.mxu0 0.0
    %616 = vmatprep.subr.mxu0 0.0
    %617 = vmatpush1.msra.mxu0 0.0
    %618 = vmatprep.subr.mxu0 0.0
    %619 = vmatpush1.msra.mxu0 0.0
    %620 = vmatprep.subr.mxu0 0.0
    %621 = vmatpush1.msra.mxu0 0.0
    %622 = vmatprep.subr.mxu0 0.0
    %623 = vmatpush1.msra.mxu0 0.0
    %624 = vmatprep.subr.mxu0 0.0
    %625 = vmatpush1.msra.mxu0 0.0
    %626 = vmatprep.subr.mxu0 0.0
    %627 = vmatpush1.msra.mxu0 0.0
    %628 = vmatprep.subr.mxu0 0.0
    %629 = vmatpush1.msra.mxu0 0.0
    %630 = vmatprep.subr.mxu0 0.0
    %631 = vmatpush1.msra.mxu0 0.0
    %632 = vmatprep.subr.mxu0 0.0
    %633 = vmatpush1.msra.mxu0 0.0
    %634 = vmatprep.subr.mxu0 0.0
    %635 = vmatpush1.msra.mxu0 0.0
    %636 = vmatprep.subr.mxu0 0.0
    %637 = vmatpush1.msra.mxu0 0.0
    %638 = vmatprep.subr.mxu0 0.0
    %639 = vmatpush1.msra.mxu0 0.0
    %640 = vmatprep.mubr.f32.mxu0 0.0
    %641 = vmatmul.mubr.f32.gmra.mrb[0].mxu0 %v558
    %v642 = vpop.f32.mrb[0].mxu0
    %v643 = vadd.f32 0.0, %v642
    %v644 = vpop.f32.mrb[0].mxu0
    %645 = vdwg.mxu0
    %v646 = vmul.f32 %v643, 0.5
    %v647 = vmul.f32 %v643, 0.70710677
    %v648 = verf.f32.pop %v647
    %v649 = vadd.f32 %v648, 1.0
    %v650 = vmul.f32 %v646, %v649
    %s651 = scalar_lea.vmem [#allocation7], 512
    %v652 = vld [vmem:[%s651] sm:$0xff]
    %v653 = vld [vmem:[%s651 + $0x8] sm:$0xff]
    %v654 = vld [vmem:[%s651 + $0x10] sm:$0xff]
    %v655 = vld [vmem:[%s651 + $0x18] sm:$0xff]
    %v656 = vld [vmem:[%s651 + $0x20] sm:$0xff]
    %v657 = vld [vmem:[%s651 + $0x28] sm:$0xff]
    %v658 = vld [vmem:[%s651 + $0x30] sm:$0xff]
    %v659 = vld [vmem:[%s651 + $0x38] sm:$0xff]
    %v660 = vld [vmem:[%s651 + $0x40] sm:$0xff]
    %v661 = vld [vmem:[%s651 + $0x48] sm:$0xff]
    %v662 = vld [vmem:[%s651 + $0x50] sm:$0xff]
    %v663 = vld [vmem:[%s651 + $0x58] sm:$0xff]
    %v664 = vld [vmem:[%s651 + $0x60] sm:$0xff]
    %v665 = vld [vmem:[%s651 + $0x68] sm:$0xff]
    %v666 = vld [vmem:[%s651 + $0x70] sm:$0xff]
    %v667 = vld [vmem:[%s651 + $0x78] sm:$0xff]
    %668 = vmatprep.subr.mxu0 0.0
    %669 = vmatpush1.msra.mxu0 %v652
    %670 = vmatprep.subr.mxu0 0.0
    %671 = vmatpush1.msra.mxu0 %v653
    %672 = vmatprep.subr.mxu0 0.0
    %673 = vmatpush1.msra.mxu0 %v654
    %674 = vmatprep.subr.mxu0 0.0
    %675 = vmatpush1.msra.mxu0 %v655
    %676 = vmatprep.subr.mxu0 0.0
    %677 = vmatpush1.msra.mxu0 %v656
    %678 = vmatprep.subr.mxu0 0.0
    %679 = vmatpush1.msra.mxu0 %v657
    %680 = vmatprep.subr.mxu0 0.0
    %681 = vmatpush1.msra.mxu0 %v658
    %682 = vmatprep.subr.mxu0 0.0
    %683 = vmatpush1.msra.mxu0 %v659
    %684 = vmatprep.subr.mxu0 0.0
    %685 = vmatpush1.msra.mxu0 %v660
    %686 = vmatprep.subr.mxu0 0.0
    %687 = vmatpush1.msra.mxu0 %v661
    %688 = vmatprep.subr.mxu0 0.0
    %689 = vmatpush1.msra.mxu0 %v662
    %690 = vmatprep.subr.mxu0 0.0
    %691 = vmatpush1.msra.mxu0 %v663
    %692 = vmatprep.subr.mxu0 0.0
    %693 = vmatpush1.msra.mxu0 %v664
    %694 = vmatprep.subr.mxu0 0.0
    %695 = vmatpush1.msra.mxu0 %v665
    %696 = vmatprep.subr.mxu0 0.0
    %697 = vmatpush1.msra.mxu0 %v666
    %698 = vmatprep.subr.mxu0 0.0
    %699 = vmatpush1.msra.mxu0 %v667
    %700 = vmatprep.subr.mxu0 0.0
    %701 = vmatpush1.msra.mxu0 0.0
    %702 = vmatprep.subr.mxu0 0.0
    %703 = vmatpush1.msra.mxu0 0.0
    %704 = vmatprep.subr.mxu0 0.0
    %705 = vmatpush1.msra.mxu0 0.0
    %706 = vmatprep.subr.mxu0 0.0
    %707 = vmatpush1.msra.mxu0 0.0
    %708 = vmatprep.subr.mxu0 0.0
    %709 = vmatpush1.msra.mxu0 0.0
    %710 = vmatprep.subr.mxu0 0.0
    %711 = vmatpush1.msra.mxu0 0.0
    %712 = vmatprep.subr.mxu0 0.0
    %713 = vmatpush1.msra.mxu0 0.0
    %714 = vmatprep.subr.mxu0 0.0
    %715 = vmatpush1.msra.mxu0 0.0
    %716 = vmatprep.subr.mxu0 0.0
    %717 = vmatpush1.msra.mxu0 0.0
    %718 = vmatprep.subr.mxu0 0.0
    %719 = vmatpush1.msra.mxu0 0.0
    %720 = vmatprep.subr.mxu0 0.0
    %721 = vmatpush1.msra.mxu0 0.0
    %722 = vmatprep.subr.mxu0 0.0
    %723 = vmatpush1.msra.mxu0 0.0
    %724 = vmatprep.subr.mxu0 0.0
    %725 = vmatpush1.msra.mxu0 0.0
    %726 = vmatprep.subr.mxu0 0.0
    %727 = vmatpush1.msra.mxu0 0.0
    %728 = vmatprep.subr.mxu0 0.0
    %729 = vmatpush1.msra.mxu0 0.0
    %730 = vmatprep.subr.mxu0 0.0
    %731 = vmatpush1.msra.mxu0 0.0
    %732 = vmatprep.mubr.f32.mxu0 0.0
    %733 = vmatmul.mubr.f32.gmra.mrb[0].mxu0 %v650
    %v734 = vpop.f32.mrb[0].mxu0
    %v735 = vadd.f32 0.0, %v734
    %v736 = vpop.f32.mrb[0].mxu0
    %737 = vdwg.mxu0
    %v738 = vmul.f32 %v735, 0.5
    %v739 = vmul.f32 %v735, 0.70710677
    %v740 = verf.f32.pop %v739
    %v741 = vadd.f32 %v740, 1.0
    %v742 = vmul.f32 %v738, %v741
    %s743 = scalar_lea.vmem [#allocation7], 640
    %v744 = vld [vmem:[%s743] sm:$0xff]
    %v745 = vld [vmem:[%s743 + $0x8] sm:$0xff]
    %v746 = vld [vmem:[%s743 + $0x10] sm:$0xff]
    %v747 = vld [vmem:[%s743 + $0x18] sm:$0xff]
    %v748 = vld [vmem:[%s743 + $0x20] sm:$0xff]
    %v749 = vld [vmem:[%s743 + $0x28] sm:$0xff]
    %v750 = vld [vmem:[%s743 + $0x30] sm:$0xff]
    %v751 = vld [vmem:[%s743 + $0x38] sm:$0xff]
    %v752 = vld [vmem:[%s743 + $0x40] sm:$0xff]
    %v753 = vld [vmem:[%s743 + $0x48] sm:$0xff]
    %v754 = vld [vmem:[%s743 + $0x50] sm:$0xff]
    %v755 = vld [vmem:[%s743 + $0x58] sm:$0xff]
    %v756 = vld [vmem:[%s743 + $0x60] sm:$0xff]
    %v757 = vld [vmem:[%s743 + $0x68] sm:$0xff]
    %v758 = vld [vmem:[%s743 + $0x70] sm:$0xff]
    %v759 = vld [vmem:[%s743 + $0x78] sm:$0xff]
    %760 = vmatprep.subr.mxu0 0.0
    %761 = vmatpush1.msra.mxu0 %v744
    %762 = vmatprep.subr.mxu0 0.0
    %763 = vmatpush1.msra.mxu0 %v745
    %764 = vmatprep.subr.mxu0 0.0
    %765 = vmatpush1.msra.mxu0 %v746
    %766 = vmatprep.subr.mxu0 0.0
    %767 = vmatpush1.msra.mxu0 %v747
    %768 = vmatprep.subr.mxu0 0.0
    %769 = vmatpush1.msra.mxu0 %v748
    %770 = vmatprep.subr.mxu0 0.0
    %771 = vmatpush1.msra.mxu0 %v749
    %772 = vmatprep.subr.mxu0 0.0
    %773 = vmatpush1.msra.mxu0 %v750
    %774 = vmatprep.subr.mxu0 0.0
    %775 = vmatpush1.msra.mxu0 %v751
    %776 = vmatprep.subr.mxu0 0.0
    %777 = vmatpush1.msra.mxu0 %v752
    %778 = vmatprep.subr.mxu0 0.0
    %779 = vmatpush1.msra.mxu0 %v753
    %780 = vmatprep.subr.mxu0 0.0
    %781 = vmatpush1.msra.mxu0 %v754
    %782 = vmatprep.subr.mxu0 0.0
    %783 = vmatpush1.msra.mxu0 %v755
    %784 = vmatprep.subr.mxu0 0.0
    %785 = vmatpush1.msra.mxu0 %v756
    %786 = vmatprep.subr.mxu0 0.0
    %787 = vmatpush1.msra.mxu0 %v757
    %788 = vmatprep.subr.mxu0 0.0
    %789 = vmatpush1.msra.mxu0 %v758
    %790 = vmatprep.subr.mxu0 0.0
    %791 = vmatpush1.msra.mxu0 %v759
    %792 = vmatprep.subr.mxu0 0.0
    %793 = vmatpush1.msra.mxu0 0.0
    %794 = vmatprep.subr.mxu0 0.0
    %795 = vmatpush1.msra.mxu0 0.0
    %796 = vmatprep.subr.mxu0 0.0
    %797 = vmatpush1.msra.mxu0 0.0
    %798 = vmatprep.subr.mxu0 0.0
    %799 = vmatpush1.msra.mxu0 0.0
    %800 = vmatprep.subr.mxu0 0.0
    %801 = vmatpush1.msra.mxu0 0.0
    %802 = vmatprep.subr.mxu0 0.0
    %803 = vmatpush1.msra.mxu0 0.0
    %804 = vmatprep.subr.mxu0 0.0
    %805 = vmatpush1.msra.mxu0 0.0
    %806 = vmatprep.subr.mxu0 0.0
    %807 = vmatpush1.msra.mxu0 0.0
    %808 = vmatprep.subr.mxu0 0.0
    %809 = vmatpush1.msra.mxu0 0.0
    %810 = vmatprep.subr.mxu0 0.0
    %811 = vmatpush1.msra.mxu0 0.0
    %812 = vmatprep.subr.mxu0 0.0
    %813 = vmatpush1.msra.mxu0 0.0
    %814 = vmatprep.subr.mxu0 0.0
    %815 = vmatpush1.msra.mxu0 0.0
    %816 = vmatprep.subr.mxu0 0.0
    %817 = vmatpush1.msra.mxu0 0.0
    %818 = vmatprep.subr.mxu0 0.0
    %819 = vmatpush1.msra.mxu0 0.0
    %820 = vmatprep.subr.mxu0 0.0
    %821 = vmatpush1.msra.mxu0 0.0
    %822 = vmatprep.subr.mxu0 0.0
    %823 = vmatpush1.msra.mxu0 0.0
    %824 = vmatprep.mubr.f32.mxu0 0.0
    %825 = vmatmul.mubr.f32.gmra.mrb[0].mxu0 %v742
    %v826 = vpop.f32.mrb[0].mxu0
    %v827 = vadd.f32 0.0, %v826
    %v828 = vpop.f32.mrb[0].mxu0
    %829 = vdwg.mxu0
    %v830 = vmul.f32 %v827, 0.5
    %v831 = vmul.f32 %v827, 0.70710677
    %v832 = verf.f32.pop %v831
    %v833 = vadd.f32 %v832, 1.0
    %v834 = vmul.f32 %v830, %v833
    %s835 = scalar_lea.vmem [#allocation7], 768
    %v836 = vld [vmem:[%s835] sm:$0xff]
    %v837 = vld [vmem:[%s835 + $0x8] sm:$0xff]
    %v838 = vld [vmem:[%s835 + $0x10] sm:$0xff]
    %v839 = vld [vmem:[%s835 + $0x18] sm:$0xff]
    %v840 = vld [vmem:[%s835 + $0x20] sm:$0xff]
    %v841 = vld [vmem:[%s835 + $0x28] sm:$0xff]
    %v842 = vld [vmem:[%s835 + $0x30] sm:$0xff]
    %v843 = vld [vmem:[%s835 + $0x38] sm:$0xff]
    %v844 = vld [vmem:[%s835 + $0x40] sm:$0xff]
    %v845 = vld [vmem:[%s835 + $0x48] sm:$0xff]
    %v846 = vld [vmem:[%s835 + $0x50] sm:$0xff]
    %v847 = vld [vmem:[%s835 + $0x58] sm:$0xff]
    %v848 = vld [vmem:[%s835 + $0x60] sm:$0xff]
    %v849 = vld [vmem:[%s835 + $0x68] sm:$0xff]
    %v850 = vld [vmem:[%s835 + $0x70] sm:$0xff]
    %v851 = vld [vmem:[%s835 + $0x78] sm:$0xff]
    %852 = vmatprep.subr.mxu0 0.0
    %853 = vmatpush1.msra.mxu0 %v836
    %854 = vmatprep.subr.mxu0 0.0
    %855 = vmatpush1.msra.mxu0 %v837
    %856 = vmatprep.subr.mxu0 0.0
    %857 = vmatpush1.msra.mxu0 %v838
    %858 = vmatprep.subr.mxu0 0.0
    %859 = vmatpush1.msra.mxu0 %v839
    %860 = vmatprep.subr.mxu0 0.0
    %861 = vmatpush1.msra.mxu0 %v840
    %862 = vmatprep.subr.mxu0 0.0
    %863 = vmatpush1.msra.mxu0 %v841
    %864 = vmatprep.subr.mxu0 0.0
    %865 = vmatpush1.msra.mxu0 %v842
    %866 = vmatprep.subr.mxu0 0.0
    %867 = vmatpush1.msra.mxu0 %v843
    %868 = vmatprep.subr.mxu0 0.0
    %869 = vmatpush1.msra.mxu0 %v844
    %870 = vmatprep.subr.mxu0 0.0
    %871 = vmatpush1.msra.mxu0 %v845
    %872 = vmatprep.subr.mxu0 0.0
    %873 = vmatpush1.msra.mxu0 %v846
    %874 = vmatprep.subr.mxu0 0.0
    %875 = vmatpush1.msra.mxu0 %v847
    %876 = vmatprep.subr.mxu0 0.0
    %877 = vmatpush1.msra.mxu0 %v848
    %878 = vmatprep.subr.mxu0 0.0
    %879 = vmatpush1.msra.mxu0 %v849
    %880 = vmatprep.subr.mxu0 0.0
    %881 = vmatpush1.msra.mxu0 %v850
    %882 = vmatprep.subr.mxu0 0.0
    %883 = vmatpush1.msra.mxu0 %v851
    %884 = vmatprep.subr.mxu0 0.0
    %885 = vmatpush1.msra.mxu0 0.0
    %886 = vmatprep.subr.mxu0 0.0
    %887 = vmatpush1.msra.mxu0 0.0
    %888 = vmatprep.subr.mxu0 0.0
    %889 = vmatpush1.msra.mxu0 0.0
    %890 = vmatprep.subr.mxu0 0.0
    %891 = vmatpush1.msra.mxu0 0.0
    %892 = vmatprep.subr.mxu0 0.0
    %893 = vmatpush1.msra.mxu0 0.0
    %894 = vmatprep.subr.mxu0 0.0
    %895 = vmatpush1.msra.mxu0 0.0
    %896 = vmatprep.subr.mxu0 0.0
    %897 = vmatpush1.msra.mxu0 0.0
    %898 = vmatprep.subr.mxu0 0.0
    %899 = vmatpush1.msra.mxu0 0.0
    %900 = vmatprep.subr.mxu0 0.0
    %901 = vmatpush1.msra.mxu0 0.0
    %902 = vmatprep.subr.mxu0 0.0
    %903 = vmatpush1.msra.mxu0 0.0
    %904 = vmatprep.subr.mxu0 0.0
    %905 = vmatpush1.msra.mxu0 0.0
    %906 = vmatprep.subr.mxu0 0.0
    %907 = vmatpush1.msra.mxu0 0.0
    %908 = vmatprep.subr.mxu0 0.0
    %909 = vmatpush1.msra.mxu0 0.0
    %910 = vmatprep.subr.mxu0 0.0
    %911 = vmatpush1.msra.mxu0 0.0
    %912 = vmatprep.subr.mxu0 0.0
    %913 = vmatpush1.msra.mxu0 0.0
    %914 = vmatprep.subr.mxu0 0.0
    %915 = vmatpush1.msra.mxu0 0.0
    %916 = vmatprep.mubr.f32.mxu0 0.0
    %917 = vmatmul.mubr.f32.gmra.mrb[0].mxu0 %v834
    %v918 = vpop.f32.mrb[0].mxu0
    %v919 = vadd.f32 0.0, %v918
    %v920 = vpop.f32.mrb[0].mxu0
    %921 = vdwg.mxu0
    %v922 = vmul.f32 %v919, 0.5
    %v923 = vmul.f32 %v919, 0.70710677
    %v924 = verf.f32.pop %v923
    %v925 = vadd.f32 %v924, 1.0
    %v926 = vmul.f32 %v922, %v925
    %v927 = vld [vmem:[#allocation8] sm:$0xff]
    %v928 = vld [vmem:[#allocation8 + $0x8] sm:$0xff]
    %v929 = vld [vmem:[#allocation8 + $0x10] sm:$0xff]
    %v930 = vld [vmem:[#allocation8 + $0x18] sm:$0xff]
    %v931 = vld [vmem:[#allocation8 + $0x20] sm:$0xff]
    %v932 = vld [vmem:[#allocation8 + $0x28] sm:$0xff]
    %v933 = vld [vmem:[#allocation8 + $0x30] sm:$0xff]
    %v934 = vld [vmem:[#allocation8 + $0x38] sm:$0xff]
    %v935 = vld [vmem:[#allocation8 + $0x40] sm:$0xff]
    %v936 = vld [vmem:[#allocation8 + $0x48] sm:$0xff]
    %v937 = vld [vmem:[#allocation8 + $0x50] sm:$0xff]
    %v938 = vld [vmem:[#allocation8 + $0x58] sm:$0xff]
    %v939 = vld [vmem:[#allocation8 + $0x60] sm:$0xff]
    %v940 = vld [vmem:[#allocation8 + $0x68] sm:$0xff]
    %v941 = vld [vmem:[#allocation8 + $0x70] sm:$0xff]
    %v942 = vld [vmem:[#allocation8 + $0x78] sm:$0xff]
    %v943 = vld [vmem:[#allocation8 + $0x80] sm:$0xff]
    %v944 = vld [vmem:[#allocation8 + $0x88] sm:$0xff]
    %v945 = vld [vmem:[#allocation8 + $0x90] sm:$0xff]
    %v946 = vld [vmem:[#allocation8 + $0x98] sm:$0xff]
    %v947 = vld [vmem:[#allocation8 + $0xa0] sm:$0xff]
    %v948 = vld [vmem:[#allocation8 + $0xa8] sm:$0xff]
    %v949 = vld [vmem:[#allocation8 + $0xb0] sm:$0xff]
    %v950 = vld [vmem:[#allocation8 + $0xb8] sm:$0xff]
    %v951 = vld [vmem:[#allocation8 + $0xc0] sm:$0xff]
    %v952 = vld [vmem:[#allocation8 + $0xc8] sm:$0xff]
    %v953 = vld [vmem:[#allocation8 + $0xd0] sm:$0xff]
    %v954 = vld [vmem:[#allocation8 + $0xd8] sm:$0xff]
    %v955 = vld [vmem:[#allocation8 + $0xe0] sm:$0xff]
    %v956 = vld [vmem:[#allocation8 + $0xe8] sm:$0xff]
    %v957 = vld [vmem:[#allocation8 + $0xf0] sm:$0xff]
    %v958 = vld [vmem:[#allocation8 + $0xf8] sm:$0xff]
    %v959 = vld [vmem:[#allocation8 + $0x100] sm:$0xff]
    %v960 = vld [vmem:[#allocation8 + $0x108] sm:$0xff]
    %v961 = vld [vmem:[#allocation8 + $0x110] sm:$0xff]
    %v962 = vld [vmem:[#allocation8 + $0x118] sm:$0xff]
    %v963 = vld [vmem:[#allocation8 + $0x120] sm:$0xff]
    %v964 = vld [vmem:[#allocation8 + $0x128] sm:$0xff]
    %v965 = vld [vmem:[#allocation8 + $0x130] sm:$0xff]
    %v966 = vld [vmem:[#allocation8 + $0x138] sm:$0xff]
    %v967 = vld [vmem:[#allocation8 + $0x140] sm:$0xff]
    %v968 = vld [vmem:[#allocation8 + $0x148] sm:$0xff]
    %v969 = vld [vmem:[#allocation8 + $0x150] sm:$0xff]
    %v970 = vld [vmem:[#allocation8 + $0x158] sm:$0xff]
    %v971 = vld [vmem:[#allocation8 + $0x160] sm:$0xff]
    %v972 = vld [vmem:[#allocation8 + $0x168] sm:$0xff]
    %v973 = vld [vmem:[#allocation8 + $0x170] sm:$0xff]
    %v974 = vld [vmem:[#allocation8 + $0x178] sm:$0xff]
    %v975 = vld [vmem:[#allocation8 + $0x180] sm:$0xff]
    %v976 = vld [vmem:[#allocation8 + $0x188] sm:$0xff]
    %v977 = vld [vmem:[#allocation8 + $0x190] sm:$0xff]
    %v978 = vld [vmem:[#allocation8 + $0x198] sm:$0xff]
    %v979 = vld [vmem:[#allocation8 + $0x1a0] sm:$0xff]
    %v980 = vld [vmem:[#allocation8 + $0x1a8] sm:$0xff]
    %v981 = vld [vmem:[#allocation8 + $0x1b0] sm:$0xff]
    %v982 = vld [vmem:[#allocation8 + $0x1b8] sm:$0xff]
    %v983 = vld [vmem:[#allocation8 + $0x1c0] sm:$0xff]
    %v984 = vld [vmem:[#allocation8 + $0x1c8] sm:$0xff]
    %v985 = vld [vmem:[#allocation8 + $0x1d0] sm:$0xff]
    %v986 = vld [vmem:[#allocation8 + $0x1d8] sm:$0xff]
    %v987 = vld [vmem:[#allocation8 + $0x1e0] sm:$0xff]
    %v988 = vld [vmem:[#allocation8 + $0x1e8] sm:$0xff]
    %v989 = vld [vmem:[#allocation8 + $0x1f0] sm:$0xff]
    %v990 = vld [vmem:[#allocation8 + $0x1f8] sm:$0xff]
    %991 = vmatprep.subr.mxu0 %v928
    %992 = vmatpush1.msra.mxu0 %v927
    %993 = vmatprep.subr.mxu0 %v932
    %994 = vmatpush1.msra.mxu0 %v931
    %995 = vmatprep.subr.mxu0 %v936
    %996 = vmatpush1.msra.mxu0 %v935
    %997 = vmatprep.subr.mxu0 %v940
    %998 = vmatpush1.msra.mxu0 %v939
    %999 = vmatprep.subr.mxu0 %v944
    %1000 = vmatpush1.msra.mxu0 %v943
    %1001 = vmatprep.subr.mxu0 %v948
    %1002 = vmatpush1.msra.mxu0 %v947
    %1003 = vmatprep.subr.mxu0 %v952
    %1004 = vmatpush1.msra.mxu0 %v951
    %1005 = vmatprep.subr.mxu0 %v956
    %1006 = vmatpush1.msra.mxu0 %v955
    %1007 = vmatprep.subr.mxu0 %v960
    %1008 = vmatpush1.msra.mxu0 %v959
    %1009 = vmatprep.subr.mxu0 %v964
    %1010 = vmatpush1.msra.mxu0 %v963
    %1011 = vmatprep.subr.mxu0 %v968
    %1012 = vmatpush1.msra.mxu0 %v967
    %1013 = vmatprep.subr.mxu0 %v972
    %1014 = vmatpush1.msra.mxu0 %v971
    %1015 = vmatprep.subr.mxu0 %v976
    %1016 = vmatpush1.msra.mxu0 %v975
    %1017 = vmatprep.subr.mxu0 %v980
    %1018 = vmatpush1.msra.mxu0 %v979
    %1019 = vmatprep.subr.mxu0 %v984
    %1020 = vmatpush1.msra.mxu0 %v983
    %1021 = vmatprep.subr.mxu0 %v988
    %1022 = vmatpush1.msra.mxu0 %v987
    %1023 = vmatprep.subr.mxu0 0.0
    %1024 = vmatpush1.msra.mxu0 0.0
    %1025 = vmatprep.subr.mxu0 0.0
    %1026 = vmatpush1.msra.mxu0 0.0
    %1027 = vmatprep.subr.mxu0 0.0
    %1028 = vmatpush1.msra.mxu0 0.0
    %1029 = vmatprep.subr.mxu0 0.0
    %1030 = vmatpush1.msra.mxu0 0.0
    %1031 = vmatprep.subr.mxu0 0.0
    %1032 = vmatpush1.msra.mxu0 0.0
    %1033 = vmatprep.subr.mxu0 0.0
    %1034 = vmatpush1.msra.mxu0 0.0
    %1035 = vmatprep.subr.mxu0 0.0
    %1036 = vmatpush1.msra.mxu0 0.0
    %1037 = vmatprep.subr.mxu0 0.0
    %1038 = vmatpush1.msra.mxu0 0.0
    %1039 = vmatprep.subr.mxu0 0.0
    %1040 = vmatpush1.msra.mxu0 0.0
    %1041 = vmatprep.subr.mxu0 0.0
    %1042 = vmatpush1.msra.mxu0 0.0
    %1043 = vmatprep.subr.mxu0 0.0
    %1044 = vmatpush1.msra.mxu0 0.0
    %1045 = vmatprep.subr.mxu0 0.0
    %1046 = vmatpush1.msra.mxu0 0.0
    %1047 = vmatprep.subr.mxu0 0.0
    %1048 = vmatpush1.msra.mxu0 0.0
    %1049 = vmatprep.subr.mxu0 0.0
    %1050 = vmatpush1.msra.mxu0 0.0
    %1051 = vmatprep.subr.mxu0 0.0
    %1052 = vmatpush1.msra.mxu0 0.0
    %1053 = vmatprep.subr.mxu0 0.0
    %1054 = vmatpush1.msra.mxu0 0.0
    %1055 = vmatprep.mubr.f32.mxu0 0.0
    %1056 = vmatmul.mubr.f32.gmra.mrb[0].mxu0 %v926
    %v1057 = vpop.f32.mrb[0].mxu0
    %v1058 = vadd.f32 0.0, %v1057
    %v1059 = vpop.f32.mrb[0].mxu0
    %v1060 = vadd.f32 0.0, %v1059
    %1061 = vdwg.mxu0
    %1062 = vmatprep.subr.mxu0 %v930
    %1063 = vmatpush1.msra.mxu0 %v929
    %1064 = vmatprep.subr.mxu0 %v934
    %1065 = vmatpush1.msra.mxu0 %v933
    %1066 = vmatprep.subr.mxu0 %v938
    %1067 = vmatpush1.msra.mxu0 %v937
    %1068 = vmatprep.subr.mxu0 %v942
    %1069 = vmatpush1.msra.mxu0 %v941
    %1070 = vmatprep.subr.mxu0 %v946
    %1071 = vmatpush1.msra.mxu0 %v945
    %1072 = vmatprep.subr.mxu0 %v950
    %1073 = vmatpush1.msra.mxu0 %v949
    %1074 = vmatprep.subr.mxu0 %v954
    %1075 = vmatpush1.msra.mxu0 %v953
    %1076 = vmatprep.subr.mxu0 %v958
    %1077 = vmatpush1.msra.mxu0 %v957
    %1078 = vmatprep.subr.mxu0 %v962
    %1079 = vmatpush1.msra.mxu0 %v961
    %1080 = vmatprep.subr.mxu0 %v966
    %1081 = vmatpush1.msra.mxu0 %v965
    %1082 = vmatprep.subr.mxu0 %v970
    %1083 = vmatpush1.msra.mxu0 %v969
    %1084 = vmatprep.subr.mxu0 %v974
    %1085 = vmatpush1.msra.mxu0 %v973
    %1086 = vmatprep.subr.mxu0 %v978
    %1087 = vmatpush1.msra.mxu0 %v977
    %1088 = vmatprep.subr.mxu0 %v982
    %1089 = vmatpush1.msra.mxu0 %v981
    %1090 = vmatprep.subr.mxu0 %v986
    %1091 = vmatpush1.msra.mxu0 %v985
    %1092 = vmatprep.subr.mxu0 %v990
    %1093 = vmatpush1.msra.mxu0 %v989
    %1094 = vmatprep.subr.mxu0 0.0
    %1095 = vmatpush1.msra.mxu0 0.0
    %1096 = vmatprep.subr.mxu0 0.0
    %1097 = vmatpush1.msra.mxu0 0.0
    %1098 = vmatprep.subr.mxu0 0.0
    %1099 = vmatpush1.msra.mxu0 0.0
    %1100 = vmatprep.subr.mxu0 0.0
    %1101 = vmatpush1.msra.mxu0 0.0
    %1102 = vmatprep.subr.mxu0 0.0
    %1103 = vmatpush1.msra.mxu0 0.0
    %1104 = vmatprep.subr.mxu0 0.0
    %1105 = vmatpush1.msra.mxu0 0.0
    %1106 = vmatprep.subr.mxu0 0.0
    %1107 = vmatpush1.msra.mxu0 0.0
    %1108 = vmatprep.subr.mxu0 0.0
    %1109 = vmatpush1.msra.mxu0 0.0
    %1110 = vmatprep.subr.mxu0 0.0
    %1111 = vmatpush1.msra.mxu0 0.0
    %1112 = vmatprep.subr.mxu0 0.0
    %1113 = vmatpush1.msra.mxu0 0.0
    %1114 = vmatprep.subr.mxu0 0.0
    %1115 = vmatpush1.msra.mxu0 0.0
    %1116 = vmatprep.subr.mxu0 0.0
    %1117 = vmatpush1.msra.mxu0 0.0
    %1118 = vmatprep.subr.mxu0 0.0
    %1119 = vmatpush1.msra.mxu0 0.0
    %1120 = vmatprep.subr.mxu0 0.0
    %1121 = vmatpush1.msra.mxu0 0.0
    %1122 = vmatprep.subr.mxu0 0.0
    %1123 = vmatpush1.msra.mxu0 0.0
    %1124 = vmatprep.subr.mxu0 0.0
    %1125 = vmatpush1.msra.mxu0 0.0
    %1126 = vmatprep.mubr.f32.mxu0 0.0
    %1127 = vmatmul.mubr.f32.gmra.mrb[0].mxu0 %v926
    %v1128 = vpop.f32.mrb[0].mxu0
    %v1129 = vadd.f32 0.0, %v1128
    %v1130 = vpop.f32.mrb[0].mxu0
    %v1131 = vadd.f32 0.0, %v1130
    %1132 = vdwg.mxu0
    %1133 = vst [vmem:[#allocation10] sm:$0xff] %v1058
    %1134 = vst [vmem:[#allocation10 + $0x8] sm:$0xff] %v1060
    %1135 = vst [vmem:[#allocation10 + $0x10] sm:$0xff] %v1129
    %1136 = vst [vmem:[#allocation10 + $0x18] sm:$0xff] %v1131
    // Predicated region
    $region34: #{tpu_custom_call.1} parent=1 // pred_check
      _
    $region35: #{tpu_custom_call.1} parent=1 // pred_check_branch
      %1138 = sbr.rel (0) target = $region37
    $region36: #{tpu_custom_call.1} parent=1 // pred_region
      %s1140 = ssub.s32 512, 512
      %1141 = vsyncadd [#allocation4], %s1140
      %s1143 = sshll.u32 [#allocation10], 4
      %s1144 = int_to_ptr.vmem [resolvable:$true] %s1143
      %1146 = dma.vmem_to_hbm [thread:$0]  %s1144, 512, %s4, [#allocation4]
    $region37: #{tpu_custom_call.1} parent=1 // pred_fallthru
      _
    // Predicated region
    $region38: #{tpu_custom_call.1} parent=1 // pred_check
      _
    $region39: #{tpu_custom_call.1} parent=1 // pred_check_branch
      %1148 = sbr.rel (0) target = $region41
    $region40: #{tpu_custom_call.1} parent=1 // pred_region
      %1149 = dma.done [#allocation4], 512
    $region41: #{tpu_custom_call.1} parent=1 // pred_fallthru
      _
    %1150 = vsyncpa [#allocation3], 1
    %1151 = vsyncpa [#allocation6], 1
    %1152 = vsyncpa [#allocation9], 1
    %1153 = vsyncpa [#allocation4], 1

</llo_original>
